<compile_context>
chip_gen: v7x
topology: tpu7x:2x2x1
jax: 0.10.0
libtpu: 0.0.40
codegen_flags: <defaults>
</compile_context>

<pallas_src>
import functools

import jax
import jax.numpy as jnp
from jax.experimental import pallas as pl
from jax.experimental.pallas import tpu as pltpu

# ----- model hyper-parameters (small variant of the PyTorch defaults) -------
NUM_ATOM_TYPE = 119
NUM_CHIRALITY_TAG = 3
NUM_BOND_TYPE = 5
NUM_BOND_DIRECTION = 3

EMB_DIM = 32           # emb_dim
HID_DIM = 2 * EMB_DIM  # GINE MLP hidden dim
FEAT_DIM = 64          # feat_dim
HALF_DIM = FEAT_DIM // 2
NUM_LAYER = 3          # num_layer
OUT_DIM = 2            # task='classification'
BN_EPS = 1e-5
LANE = 128             # TPU lane width; slab / output lane-padded to this

_VSPEC = pl.BlockSpec(memory_space=pltpu.MemorySpace.VMEM)


# ---------------------------------------------------------------------------
# Fused Pallas kernel: 3x (GINEConv + folded-BN [+ ReLU]) + mean-pool + head
# ---------------------------------------------------------------------------
def _softplus(x):
    # matches torch.nn.Softplus(beta=1, threshold=20)
    return jnp.where(x > 20.0, x, jnp.log1p(jnp.exp(jnp.minimum(x, 20.0))))


def _fused_kernel(off, a_ref, h0_ref, esum_ref, p_ref, slab_ref, out_ref):
    """Whole AGILEncoder forward on resident VMEM data.

    aggr_l = A @ h + esum_l                       (messages are linear: x_j + e)
    h      = W2' @ relu(W1 @ aggr_l + b1) + b2'   (BN folded into W2'/b2')
    h      = relu(h)  except after the last layer (dropout = identity in eval)
    pooled = P @ h                                 (global mean pool)
    out    = [feat_lin(pooled) | pred_head(feat)]  written as one (G,128) slab
    """
    a = a_ref[...]
    h = h0_ref[...]

    for layer in range(NUM_LAYER):
        w1 = slab_ref[off[f"w1_{layer}"]:off[f"w1_{layer}"] + EMB_DIM, 0:HID_DIM]
        b1 = slab_ref[off[f"b1_{layer}"]:off[f"b1_{layer}"] + 1, 0:HID_DIM]
        w2 = slab_ref[off[f"w2_{layer}"]:off[f"w2_{layer}"] + HID_DIM, 0:EMB_DIM]
        b2 = slab_ref[off[f"b2_{layer}"]:off[f"b2_{layer}"] + 1, 0:EMB_DIM]

        aggr = jnp.dot(a, h, preferred_element_type=jnp.float32) + esum_ref[layer]
        hid = jnp.maximum(
            jnp.dot(aggr, w1, preferred_element_type=jnp.float32) + b1, 0.0)
        h = jnp.dot(hid, w2, preferred_element_type=jnp.float32) + b2
        if layer != NUM_LAYER - 1:
            h = jnp.maximum(h, 0.0)

    # global mean pool via the (G, N) pooling matrix
    pooled = jnp.dot(p_ref[...], h, preferred_element_type=jnp.float32)  # (G, EMB)

    # feat_lin: weights lane-padded to 128 cols (real data in cols 0:FEAT_DIM)
    feat_w = slab_ref[off["feat_w"]:off["feat_w"] + EMB_DIM, :]          # (EMB, 128)
    feat_b = slab_ref[off["feat_b"]:off["feat_b"] + 1, :]                # (1, 128)
    feat128 = jnp.dot(pooled, feat_w, preferred_element_type=jnp.float32) + feat_b

    # pred head: Linear -> Softplus -> Linear -> Softplus -> Linear
    # pw1 is row-padded to 128 so the lane-padded feat128 feeds it directly.
    pw1 = slab_ref[off["pw1"]:off["pw1"] + LANE, 0:HALF_DIM]             # (128, 32)
    pb1 = slab_ref[off["pb1"]:off["pb1"] + 1, 0:HALF_DIM]
    pw2 = slab_ref[off["pw2"]:off["pw2"] + HALF_DIM, 0:HALF_DIM]
    pb2 = slab_ref[off["pb2"]:off["pb2"] + 1, 0:HALF_DIM]
    # pw3/pb3 are placed at cols [FEAT_DIM, FEAT_DIM+OUT_DIM) so the final matmul
    # already lands pred in its output slot (zeros elsewhere).
    pw3 = slab_ref[off["pw3"]:off["pw3"] + HALF_DIM, :]                  # (32, 128)
    pb3 = slab_ref[off["pb3"]:off["pb3"] + 1, :]                         # (1, 128)

    z = _softplus(jnp.dot(feat128, pw1, preferred_element_type=jnp.float32) + pb1)
    z = _softplus(jnp.dot(z, pw2, preferred_element_type=jnp.float32) + pb2)
    pred128 = jnp.dot(z, pw3, preferred_element_type=jnp.float32) + pb3

    # feat128 is zero in cols >= FEAT_DIM, pred128 is zero outside [FEAT_DIM,
    # FEAT_DIM+OUT_DIM) -> one full-lane (unmasked) store carries both results.
    out_ref[...] = feat128 + pred128


def fused_forward(adj, h0, esum_all, p_mat, slab, offsets):
    g = p_mat.shape[0]
    kern = functools.partial(_fused_kernel, offsets)
    out = pl.pallas_call(
        kern,
        out_shape=jax.ShapeDtypeStruct((g, LANE), jnp.float32),
        in_specs=[_VSPEC] * 5,
        out_specs=_VSPEC,
    )(adj, h0, esum_all, p_mat, slab)
    return out[:, :FEAT_DIM], out[:, FEAT_DIM:FEAT_DIM + OUT_DIM]


# ---------------------------------------------------------------------------
# Deterministic parameter init (shapes follow AGILEncoder.__init__)
# ---------------------------------------------------------------------------
def _xavier_uniform(key, shape):
    a = (6.0 / (shape[0] + shape[1])) ** 0.5
    return jax.random.uniform(key, shape, jnp.float32, -a, a)


def _linear(key, in_dim, out_dim):
    k1, k2 = jax.random.split(key)
    bound = 1.0 / (in_dim ** 0.5)
    w = jax.random.uniform(k1, (in_dim, out_dim), jnp.float32, -bound, bound)
    b = jax.random.uniform(k2, (1, out_dim), jnp.float32, -bound, bound)
    return w, b


def init_params(key):
    keys = jax.random.split(key, 8 + NUM_LAYER)
    params = {
        "x_emb1": _xavier_uniform(keys[0], (NUM_ATOM_TYPE, EMB_DIM)),
        "x_emb2": _xavier_uniform(keys[1], (NUM_CHIRALITY_TAG, EMB_DIM)),
        "gnn": [],
    }
    for layer in range(NUM_LAYER):
        lk = jax.random.split(keys[2 + layer], 4)
        w1, b1 = _linear(lk[0], EMB_DIM, HID_DIM)
        w2, b2 = _linear(lk[1], HID_DIM, EMB_DIM)
        params["gnn"].append({
            "edge_emb1": _xavier_uniform(lk[2], (NUM_BOND_TYPE, EMB_DIM)),
            "edge_emb2": _xavier_uniform(lk[3], (NUM_BOND_DIRECTION, EMB_DIM)),
            "w1": w1, "b1": b1, "w2": w2, "b2": b2,
            # fresh BatchNorm1d (eval mode): gamma=1, beta=0, mean=0, var=1
            "bn_gamma": jnp.ones((1, EMB_DIM), jnp.float32),
            "bn_beta": jnp.zeros((1, EMB_DIM), jnp.float32),
            "bn_mean": jnp.zeros((1, EMB_DIM), jnp.float32),
            "bn_var": jnp.ones((1, EMB_DIM), jnp.float32),
        })
    # feat_lin + pred_head (softplus variant, pred_n_layer=2)
    params["feat_w"], params["feat_b"] = _linear(keys[2 + NUM_LAYER], EMB_DIM, FEAT_DIM)
    params["pw1"], params["pb1"] = _linear(keys[3 + NUM_LAYER], FEAT_DIM, HALF_DIM)
    params["pw2"], params["pb2"] = _linear(keys[4 + NUM_LAYER], HALF_DIM, HALF_DIM)
    params["pw3"], params["pb3"] = _linear(keys[5 + NUM_LAYER], HALF_DIM, OUT_DIM)
    return params


# ---------------------------------------------------------------------------
# Host-side prep: fold BN into W2/b2 and pack all weights into one lane-padded
# (rows, 128) slab. Row offsets are static Python ints (sublane-aligned).
# ---------------------------------------------------------------------------
def _fold_bn(w2, b2, gamma, beta, mean, var):
    scale = gamma * jax.lax.rsqrt(var + BN_EPS)           # (1, EMB)
    return w2 * scale, (b2 - mean) * scale + beta


def build_param_slab(params):
    blocks, offsets = [], {}
    cursor = 0

    def add(name, arr, rows=None, col_off=0):
        nonlocal cursor
        r, c = arr.shape
        rp = rows if rows is not None else -(-r // 8) * 8   # pad rows to mult of 8
        blk = jnp.zeros((rp, LANE), jnp.float32).at[:r, col_off:col_off + c].set(arr)
        blocks.append(blk)
        offsets[name] = cursor
        cursor += rp

    for layer in range(NUM_LAYER):
        lp = params["gnn"][layer]
        w2f, b2f = _fold_bn(lp["w2"], lp["b2"], lp["bn_gamma"], lp["bn_beta"],
                            lp["bn_mean"], lp["bn_var"])
        add(f"w1_{layer}", lp["w1"])
        add(f"b1_{layer}", lp["b1"])
        add(f"w2_{layer}", w2f)
        add(f"b2_{layer}", b2f)

    add("feat_w", params["feat_w"])                   # (EMB, FEAT) in cols 0:64
    add("feat_b", params["feat_b"])
    add("pw1", params["pw1"], rows=LANE)              # row-padded to 128
    add("pb1", params["pb1"])
    add("pw2", params["pw2"])
    add("pb2", params["pb2"])
    add("pw3", params["pw3"], col_off=FEAT_DIM)       # lands pred in cols 64:66
    add("pb3", params["pb3"], col_off=FEAT_DIM)

    return jnp.concatenate(blocks, axis=0), offsets


# ---------------------------------------------------------------------------
# Forward pass (index/gather glue in JAX, all dense math in one Pallas kernel)
# ---------------------------------------------------------------------------
def agile_encoder_forward(params, slab, offsets, x, edge_index, edge_attr,
                          batch, n_graphs):
    n = x.shape[0]
    # initial node embedding lookup (gather = glue)
    h0 = params["x_emb1"][x[:, 0]] + params["x_emb2"][x[:, 1]]

    # add_self_loops + self-loop edge_attr = [4, 0]
    loop = jnp.arange(n, dtype=edge_index.dtype)
    src_ext = jnp.concatenate([edge_index[0], loop])
    dst_ext = jnp.concatenate([edge_index[1], loop])
    self_loop_attr = jnp.concatenate(
        [jnp.full((n, 1), 4, dtype=edge_attr.dtype),
         jnp.zeros((n, 1), dtype=edge_attr.dtype)], axis=1)
    edge_attr_ext = jnp.concatenate([edge_attr, self_loop_attr], axis=0)

    # dense adjacency for sum-aggregation: A[dst, src] = multiplicity
    adj = jnp.zeros((n, n), jnp.float32).at[dst_ext, src_ext].add(1.0)

    # per-layer edge-embedding sums (independent of h) -> single stacked input
    esum_layers = []
    for layer in range(NUM_LAYER):
        lp = params["gnn"][layer]
        edge_emb = (lp["edge_emb1"][edge_attr_ext[:, 0]]
                    + lp["edge_emb2"][edge_attr_ext[:, 1]])
        esum_layers.append(
            jnp.zeros((n, EMB_DIM), jnp.float32).at[dst_ext].add(edge_emb))
    esum_all = jnp.stack(esum_layers, axis=0)               # (L, N, EMB)

    # global_mean_pool as a (G, N) pooling matrix
    counts = jnp.zeros((n_graphs,), jnp.float32).at[batch].add(1.0)
    p_mat = jnp.zeros((n_graphs, n), jnp.float32).at[
        batch, jnp.arange(n)].set(1.0 / counts[batch])

    return fused_forward(adj, h0, esum_all, p_mat, slab, offsets)


# ---------------------------------------------------------------------------
if __name__ == "__main__":
    key = jax.random.PRNGKey(0)
    ks = jax.random.split(key, 6)

    N_NODES, N_EDGES, N_GRAPHS = 16, 24, 2
    x = jnp.stack(
        [jax.random.randint(ks[0], (N_NODES,), 0, NUM_ATOM_TYPE),
         jax.random.randint(ks[1], (N_NODES,), 0, NUM_CHIRALITY_TAG)], axis=1
    ).astype(jnp.int32)
    edge_index = jnp.stack(
        [jax.random.randint(ks[2], (N_EDGES,), 0, N_NODES),
         jax.random.randint(ks[3], (N_EDGES,), 0, N_NODES)], axis=0
    ).astype(jnp.int32)
    edge_attr = jnp.stack(
        [jax.random.randint(ks[4], (N_EDGES,), 0, NUM_BOND_TYPE - 1),  # 4 = self-loop
         jax.random.randint(ks[5], (N_EDGES,), 0, NUM_BOND_DIRECTION)], axis=1
    ).astype(jnp.int32)
    batch = jnp.array([0] * 8 + [1] * 8, dtype=jnp.int32)  # 2 graphs, 8 nodes each

    params = init_params(jax.random.PRNGKey(42))
    slab, offsets = build_param_slab(params)               # one-time host prep

    h_graph, pred = agile_encoder_forward(
        params, slab, offsets, x, edge_index, edge_attr, batch, N_GRAPHS)
    jax.block_until_ready((h_graph, pred))
    assert h_graph.shape == (N_GRAPHS, FEAT_DIM) and pred.shape == (N_GRAPHS, OUT_DIM)
    print("KERNEL_OK")
</pallas_src>

<mosaic_0001>
module attributes {stable_mosaic.version = 11 : i64} {
  func.func @_fused_kernel(%arg0: memref<16x16xf32, #tpu.memory_space<vmem>>, %arg1: memref<16x32xf32, #tpu.memory_space<vmem>>, %arg2: memref<3x16x32xf32, #tpu.memory_space<vmem>>, %arg3: memref<2x16xf32, #tpu.memory_space<vmem>>, %arg4: memref<592x128xf32, #tpu.memory_space<vmem>>, %arg5: memref<2x128xf32, #tpu.memory_space<vmem>>) attributes {dimension_semantics = [], scalar_prefetch = 0 : i64, scratch_operands = 0 : i64, tpu.core_type = #tpu.core_type<tc>} {
    %c0 = arith.constant 0 : index
    %c0_0 = arith.constant 0 : index
    %0 = vector.load %arg0[%c0, %c0_0] : memref<16x16xf32, #tpu.memory_space<vmem>>, vector<16x16xf32>
    %c0_1 = arith.constant 0 : index
    %c0_2 = arith.constant 0 : index
    %1 = vector.load %arg1[%c0_1, %c0_2] : memref<16x32xf32, #tpu.memory_space<vmem>>, vector<16x32xf32>
    %c0_3 = arith.constant 0 : index
    %c0_4 = arith.constant 0 : index
    %2 = vector.load %arg4[%c0_3, %c0_4] : memref<592x128xf32, #tpu.memory_space<vmem>>, vector<32x64xf32>
    %c32 = arith.constant 32 : index
    %c0_5 = arith.constant 0 : index
    %3 = vector.load %arg4[%c32, %c0_5] : memref<592x128xf32, #tpu.memory_space<vmem>>, vector<1x64xf32>
    %c40 = arith.constant 40 : index
    %c0_6 = arith.constant 0 : index
    %4 = vector.load %arg4[%c40, %c0_6] : memref<592x128xf32, #tpu.memory_space<vmem>>, vector<64x32xf32>
    %c104 = arith.constant 104 : index
    %c0_7 = arith.constant 0 : index
    %5 = vector.load %arg4[%c104, %c0_7] : memref<592x128xf32, #tpu.memory_space<vmem>>, vector<1x32xf32>
    %cst = arith.constant dense<0.000000e+00> : vector<16x32xf32>
    %6 = tpu.matmul %0, %1, %cst {dimension_numbers = #tpu.dot_dimension_numbers<[1], [0], [0], [1], [0, 0, 1, 1], [], []>} : vector<16x16xf32>, vector<16x32xf32>, vector<16x32xf32> -> vector<16x32xf32>
    %c0_8 = arith.constant 0 : index
    %c0_9 = arith.constant 0 : index
    %c0_10 = arith.constant 0 : index
    %7 = vector.load %arg2[%c0_8, %c0_9, %c0_10] : memref<3x16x32xf32, #tpu.memory_space<vmem>>, vector<1x16x32xf32>
    %8 = vector.shape_cast %7 : vector<1x16x32xf32> to vector<16x32xf32>
    %9 = arith.addf %6, %8 : vector<16x32xf32>
    %cst_11 = arith.constant dense<0.000000e+00> : vector<16x64xf32>
    %10 = tpu.matmul %9, %2, %cst_11 {dimension_numbers = #tpu.dot_dimension_numbers<[1], [0], [0], [1], [0, 0, 1, 1], [], []>} : vector<16x32xf32>, vector<32x64xf32>, vector<16x64xf32> -> vector<16x64xf32>
    %11 = vector.broadcast %3 : vector<1x64xf32> to vector<16x64xf32>
    %12 = arith.addf %10, %11 : vector<16x64xf32>
    %cst_12 = arith.constant 0.000000e+00 : f32
    %13 = vector.broadcast %cst_12 : f32 to vector<16x64xf32>
    %14 = arith.maximumf %12, %13 : vector<16x64xf32>
    %cst_13 = arith.constant dense<0.000000e+00> : vector<16x32xf32>
    %15 = tpu.matmul %14, %4, %cst_13 {dimension_numbers = #tpu.dot_dimension_numbers<[1], [0], [0], [1], [0, 0, 1, 1], [], []>} : vector<16x64xf32>, vector<64x32xf32>, vector<16x32xf32> -> vector<16x32xf32>
    %16 = vector.broadcast %5 : vector<1x32xf32> to vector<16x32xf32>
    %17 = arith.addf %15, %16 : vector<16x32xf32>
    %cst_14 = arith.constant 0.000000e+00 : f32
    %18 = vector.broadcast %cst_14 : f32 to vector<16x32xf32>
    %19 = arith.maximumf %17, %18 : vector<16x32xf32>
    %c112 = arith.constant 112 : index
    %c0_15 = arith.constant 0 : index
    %20 = vector.load %arg4[%c112, %c0_15] : memref<592x128xf32, #tpu.memory_space<vmem>>, vector<32x64xf32>
    %c144 = arith.constant 144 : index
    %c0_16 = arith.constant 0 : index
    %21 = vector.load %arg4[%c144, %c0_16] : memref<592x128xf32, #tpu.memory_space<vmem>>, vector<1x64xf32>
    %c152 = arith.constant 152 : index
    %c0_17 = arith.constant 0 : index
    %22 = vector.load %arg4[%c152, %c0_17] : memref<592x128xf32, #tpu.memory_space<vmem>>, vector<64x32xf32>
    %c216 = arith.constant 216 : index
    %c0_18 = arith.constant 0 : index
    %23 = vector.load %arg4[%c216, %c0_18] : memref<592x128xf32, #tpu.memory_space<vmem>>, vector<1x32xf32>
    %cst_19 = arith.constant dense<0.000000e+00> : vector<16x32xf32>
    %24 = tpu.matmul %0, %19, %cst_19 {dimension_numbers = #tpu.dot_dimension_numbers<[1], [0], [0], [1], [0, 0, 1, 1], [], []>} : vector<16x16xf32>, vector<16x32xf32>, vector<16x32xf32> -> vector<16x32xf32>
    %c1 = arith.constant 1 : index
    %c0_20 = arith.constant 0 : index
    %c0_21 = arith.constant 0 : index
    %25 = vector.load %arg2[%c1, %c0_20, %c0_21] : memref<3x16x32xf32, #tpu.memory_space<vmem>>, vector<1x16x32xf32>
    %26 = vector.shape_cast %25 : vector<1x16x32xf32> to vector<16x32xf32>
    %27 = arith.addf %24, %26 : vector<16x32xf32>
    %cst_22 = arith.constant dense<0.000000e+00> : vector<16x64xf32>
    %28 = tpu.matmul %27, %20, %cst_22 {dimension_numbers = #tpu.dot_dimension_numbers<[1], [0], [0], [1], [0, 0, 1, 1], [], []>} : vector<16x32xf32>, vector<32x64xf32>, vector<16x64xf32> -> vector<16x64xf32>
    %29 = vector.broadcast %21 : vector<1x64xf32> to vector<16x64xf32>
    %30 = arith.addf %28, %29 : vector<16x64xf32>
    %cst_23 = arith.constant 0.000000e+00 : f32
    %31 = vector.broadcast %cst_23 : f32 to vector<16x64xf32>
    %32 = arith.maximumf %30, %31 : vector<16x64xf32>
    %cst_24 = arith.constant dense<0.000000e+00> : vector<16x32xf32>
    %33 = tpu.matmul %32, %22, %cst_24 {dimension_numbers = #tpu.dot_dimension_numbers<[1], [0], [0], [1], [0, 0, 1, 1], [], []>} : vector<16x64xf32>, vector<64x32xf32>, vector<16x32xf32> -> vector<16x32xf32>
    %34 = vector.broadcast %23 : vector<1x32xf32> to vector<16x32xf32>
    %35 = arith.addf %33, %34 : vector<16x32xf32>
    %cst_25 = arith.constant 0.000000e+00 : f32
    %36 = vector.broadcast %cst_25 : f32 to vector<16x32xf32>
    %37 = arith.maximumf %35, %36 : vector<16x32xf32>
    %c224 = arith.constant 224 : index
    %c0_26 = arith.constant 0 : index
    %38 = vector.load %arg4[%c224, %c0_26] : memref<592x128xf32, #tpu.memory_space<vmem>>, vector<32x64xf32>
    %c256 = arith.constant 256 : index
    %c0_27 = arith.constant 0 : index
    %39 = vector.load %arg4[%c256, %c0_27] : memref<592x128xf32, #tpu.memory_space<vmem>>, vector<1x64xf32>
    %c264 = arith.constant 264 : index
    %c0_28 = arith.constant 0 : index
    %40 = vector.load %arg4[%c264, %c0_28] : memref<592x128xf32, #tpu.memory_space<vmem>>, vector<64x32xf32>
    %c328 = arith.constant 328 : index
    %c0_29 = arith.constant 0 : index
    %41 = vector.load %arg4[%c328, %c0_29] : memref<592x128xf32, #tpu.memory_space<vmem>>, vector<1x32xf32>
    %cst_30 = arith.constant dense<0.000000e+00> : vector<16x32xf32>
    %42 = tpu.matmul %0, %37, %cst_30 {dimension_numbers = #tpu.dot_dimension_numbers<[1], [0], [0], [1], [0, 0, 1, 1], [], []>} : vector<16x16xf32>, vector<16x32xf32>, vector<16x32xf32> -> vector<16x32xf32>
    %c2 = arith.constant 2 : index
    %c0_31 = arith.constant 0 : index
    %c0_32 = arith.constant 0 : index
    %43 = vector.load %arg2[%c2, %c0_31, %c0_32] : memref<3x16x32xf32, #tpu.memory_space<vmem>>, vector<1x16x32xf32>
    %44 = vector.shape_cast %43 : vector<1x16x32xf32> to vector<16x32xf32>
    %45 = arith.addf %42, %44 : vector<16x32xf32>
    %cst_33 = arith.constant dense<0.000000e+00> : vector<16x64xf32>
    %46 = tpu.matmul %45, %38, %cst_33 {dimension_numbers = #tpu.dot_dimension_numbers<[1], [0], [0], [1], [0, 0, 1, 1], [], []>} : vector<16x32xf32>, vector<32x64xf32>, vector<16x64xf32> -> vector<16x64xf32>
    %47 = vector.broadcast %39 : vector<1x64xf32> to vector<16x64xf32>
    %48 = arith.addf %46, %47 : vector<16x64xf32>
    %cst_34 = arith.constant 0.000000e+00 : f32
    %49 = vector.broadcast %cst_34 : f32 to vector<16x64xf32>
    %50 = arith.maximumf %48, %49 : vector<16x64xf32>
    %cst_35 = arith.constant dense<0.000000e+00> : vector<16x32xf32>
    %51 = tpu.matmul %50, %40, %cst_35 {dimension_numbers = #tpu.dot_dimension_numbers<[1], [0], [0], [1], [0, 0, 1, 1], [], []>} : vector<16x64xf32>, vector<64x32xf32>, vector<16x32xf32> -> vector<16x32xf32>
    %52 = vector.broadcast %41 : vector<1x32xf32> to vector<16x32xf32>
    %53 = arith.addf %51, %52 : vector<16x32xf32>
    %c0_36 = arith.constant 0 : index
    %c0_37 = arith.constant 0 : index
    %54 = vector.load %arg3[%c0_36, %c0_37] : memref<2x16xf32, #tpu.memory_space<vmem>>, vector<2x16xf32>
    %cst_38 = arith.constant dense<0.000000e+00> : vector<2x32xf32>
    %55 = tpu.matmul %54, %53, %cst_38 {dimension_numbers = #tpu.dot_dimension_numbers<[1], [0], [0], [1], [0, 0, 1, 1], [], []>} : vector<2x16xf32>, vector<16x32xf32>, vector<2x32xf32> -> vector<2x32xf32>
    %c336 = arith.constant 336 : index
    %c0_39 = arith.constant 0 : index
    %56 = vector.load %arg4[%c336, %c0_39] : memref<592x128xf32, #tpu.memory_space<vmem>>, vector<32x128xf32>
    %c368 = arith.constant 368 : index
    %c0_40 = arith.constant 0 : index
    %57 = vector.load %arg4[%c368, %c0_40] : memref<592x128xf32, #tpu.memory_space<vmem>>, vector<1x128xf32>
    %cst_41 = arith.constant dense<0.000000e+00> : vector<2x128xf32>
    %58 = tpu.matmul %55, %56, %cst_41 {dimension_numbers = #tpu.dot_dimension_numbers<[1], [0], [0], [1], [0, 0, 1, 1], [], []>} : vector<2x32xf32>, vector<32x128xf32>, vector<2x128xf32> -> vector<2x128xf32>
    %59 = vector.broadcast %57 : vector<1x128xf32> to vector<2x128xf32>
    %60 = arith.addf %58, %59 : vector<2x128xf32>
    %c376 = arith.constant 376 : index
    %c0_42 = arith.constant 0 : index
    %61 = vector.load %arg4[%c376, %c0_42] : memref<592x128xf32, #tpu.memory_space<vmem>>, vector<128x32xf32>
    %c504 = arith.constant 504 : index
    %c0_43 = arith.constant 0 : index
    %62 = vector.load %arg4[%c504, %c0_43] : memref<592x128xf32, #tpu.memory_space<vmem>>, vector<1x32xf32>
    %c512 = arith.constant 512 : index
    %c0_44 = arith.constant 0 : index
    %63 = vector.load %arg4[%c512, %c0_44] : memref<592x128xf32, #tpu.memory_space<vmem>>, vector<32x32xf32>
    %c544 = arith.constant 544 : index
    %c0_45 = arith.constant 0 : index
    %64 = vector.load %arg4[%c544, %c0_45] : memref<592x128xf32, #tpu.memory_space<vmem>>, vector<1x32xf32>
    %c552 = arith.constant 552 : index
    %c0_46 = arith.constant 0 : index
    %65 = vector.load %arg4[%c552, %c0_46] : memref<592x128xf32, #tpu.memory_space<vmem>>, vector<32x128xf32>
    %c584 = arith.constant 584 : index
    %c0_47 = arith.constant 0 : index
    %66 = vector.load %arg4[%c584, %c0_47] : memref<592x128xf32, #tpu.memory_space<vmem>>, vector<1x128xf32>
    %cst_48 = arith.constant dense<0.000000e+00> : vector<2x32xf32>
    %67 = tpu.matmul %60, %61, %cst_48 {dimension_numbers = #tpu.dot_dimension_numbers<[1], [0], [0], [1], [0, 0, 1, 1], [], []>} : vector<2x128xf32>, vector<128x32xf32>, vector<2x32xf32> -> vector<2x32xf32>
    %68 = vector.broadcast %62 : vector<1x32xf32> to vector<2x32xf32>
    %69 = arith.addf %67, %68 : vector<2x32xf32>
    %cst_49 = arith.constant 2.000000e+01 : f32
    %70 = vector.broadcast %cst_49 : f32 to vector<2x32xf32>
    %71 = arith.cmpf ogt, %69, %70 : vector<2x32xf32>
    %cst_50 = arith.constant 2.000000e+01 : f32
    %72 = vector.broadcast %cst_50 : f32 to vector<2x32xf32>
    %73 = arith.minimumf %69, %72 : vector<2x32xf32>
    %74 = math.exp %73 : vector<2x32xf32>
    %75 = math.log1p %74 : vector<2x32xf32>
    %76 = arith.select %71, %69, %75 : vector<2x32xi1>, vector<2x32xf32>
    %cst_51 = arith.constant dense<0.000000e+00> : vector<2x32xf32>
    %77 = tpu.matmul %76, %63, %cst_51 {dimension_numbers = #tpu.dot_dimension_numbers<[1], [0], [0], [1], [0, 0, 1, 1], [], []>} : vector<2x32xf32>, vector<32x32xf32>, vector<2x32xf32> -> vector<2x32xf32>
    %78 = vector.broadcast %64 : vector<1x32xf32> to vector<2x32xf32>
    %79 = arith.addf %77, %78 : vector<2x32xf32>
    %cst_52 = arith.constant 2.000000e+01 : f32
    %80 = vector.broadcast %cst_52 : f32 to vector<2x32xf32>
    %81 = arith.cmpf ogt, %79, %80 : vector<2x32xf32>
    %cst_53 = arith.constant 2.000000e+01 : f32
    %82 = vector.broadcast %cst_53 : f32 to vector<2x32xf32>
    %83 = arith.minimumf %79, %82 : vector<2x32xf32>
    %84 = math.exp %83 : vector<2x32xf32>
    %85 = math.log1p %84 : vector<2x32xf32>
    %86 = arith.select %81, %79, %85 : vector<2x32xi1>, vector<2x32xf32>
    %cst_54 = arith.constant dense<0.000000e+00> : vector<2x128xf32>
    %87 = tpu.matmul %86, %65, %cst_54 {dimension_numbers = #tpu.dot_dimension_numbers<[1], [0], [0], [1], [0, 0, 1, 1], [], []>} : vector<2x32xf32>, vector<32x128xf32>, vector<2x128xf32> -> vector<2x128xf32>
    %88 = vector.broadcast %66 : vector<1x128xf32> to vector<2x128xf32>
    %89 = arith.addf %87, %88 : vector<2x128xf32>
    %90 = arith.addf %60, %89 : vector<2x128xf32>
    %c0_55 = arith.constant 0 : index
    %c0_56 = arith.constant 0 : index
    %91 = vector.load %arg5[%c0_55, %c0_56] : memref<2x128xf32, #tpu.memory_space<vmem>>, vector<2x128xf32>
    tpu.vector_store %arg5[%c0_55, %c0_56], %90 {strides = array<i32>} : memref<2x128xf32, #tpu.memory_space<vmem>>, vector<2x128xf32>,
    return
  }
}

</mosaic_0001>

<llo_original>
// kernel: tpu_custom_call.1
$region0: #{tpu_custom_call.1}
  #allocation0 [shape = 'u32[]', space=smem, size = 0x4, offset = 0x4, fixed_abs, tag = 'smem constant byte address 0x4 - core index']
  #allocation1 [shape = 'u32[144,128]{1,0:T(1,128)}', space=vmem, size = 0x12000, scoped, tag = 'internal scratch']
  %s0 = inlined_call_operand.hbm [shape: f32[16,16], index: 0, kind: input, shape index: {}]
  %s1 = inlined_call_operand.hbm [shape: f32[16,32], index: 1, kind: input, shape index: {}]
  %s2 = inlined_call_operand.hbm [shape: f32[3,16,32], index: 2, kind: input, shape index: {}]
  %s3 = inlined_call_operand.vmem [shape: f32[2,16], index: 3, kind: input, shape index: {}]
  %s4 = inlined_call_operand.hbm [shape: f32[592,128], index: 4, kind: input, shape index: {}]
  %s5 = inlined_call_operand.hbm [shape: f32[2,128], index: 5, kind: output, shape index: {}]
  %s6 = sld [smem:[#allocation0]]
  $region46: #{tpu_custom_call.1} parent=0
    _
  %s8 = ssub.s32 1, %s6
  %s9 = scalar_select 0, %s8, %s6
  $region1: #{tpu_custom_call.1} parent=0
    #allocation2 [shape = 'u8[8192]{0}', space=vmem, size = 0x2000, scoped, tag = 'input window, operand 0, single buffered']
    #allocation3 [shape = 's32[1]{0}', space=sflag, size = 0x4, scoped, tag = 'scoped memory for tpu_custom_call.1']
    #allocation4 [shape = 's32[1]{0}', space=sflag, size = 0x4, scoped, tag = 'scoped memory for tpu_custom_call.1']
    #allocation5 [shape = 'u8[8192]{0}', space=vmem, size = 0x2000, scoped, tag = 'input window, operand 1, single buffered']
    #allocation6 [shape = 's32[1]{0}', space=sflag, size = 0x4, scoped, tag = 'scoped memory for tpu_custom_call.1']
    #allocation7 [shape = 'u8[24576]{0}', space=vmem, size = 0x6000, scoped, tag = 'input window, operand 2, single buffered']
    #allocation8 [shape = 'u8[303104]{0}', space=vmem, size = 0x4a000, scoped, tag = 'input window, operand 4, single buffered']
    #allocation9 [shape = 's32[1]{0}', space=sflag, size = 0x4, scoped, tag = 'scoped memory for tpu_custom_call.1']
    #allocation10 [shape = 'u8[1024]{0}', space=vmem, size = 0x400, scoped, tag = 'output window, operand 0, single buffered']
    %10 = vsyncpa [#allocation3], 0
    %11 = vsyncpa [#allocation6], 0
    %12 = vsyncpa [#allocation9], 0
    %13 = vsyncpa [#allocation4], 0
    // Predicated region
    $region2: #{tpu_custom_call.1} parent=1 // pred_check
      _
    $region3: #{tpu_custom_call.1} parent=1 // pred_check_branch
      %15 = sbr.rel (0) target = $region5
    $region4: #{tpu_custom_call.1} parent=1 // pred_region
      %s17 = ssub.s32 256, 256
      %18 = vsyncadd [#allocation3], %s17
      %s19 = sshll.u32 [#allocation2], 4
      %s20 = int_to_ptr.vmem [resolvable:$true] %s19
      %25 = dma.hbm_to_vmem [thread:$0]  %s0, 256, %s20, [#allocation3], 128, 128, 8
    $region5: #{tpu_custom_call.1} parent=1 // pred_fallthru
      _
    // Predicated region
    $region6: #{tpu_custom_call.1} parent=1 // pred_check
      _
    $region7: #{tpu_custom_call.1} parent=1 // pred_check_branch
      %27 = sbr.rel (0) target = $region9
    $region8: #{tpu_custom_call.1} parent=1 // pred_region
      %s29 = ssub.s32 256, 256
      %30 = vsyncadd [#allocation6], %s29
      %s31 = sshll.u32 [#allocation5], 4
      %s32 = int_to_ptr.vmem [resolvable:$true] %s31
      %37 = dma.hbm_to_vmem [thread:$0]  %s1, 256, %s32, [#allocation6], 128, 128, 8
    $region9: #{tpu_custom_call.1} parent=1 // pred_fallthru
      _
    // Predicated region
    $region10: #{tpu_custom_call.1} parent=1 // pred_check
      _
    $region11: #{tpu_custom_call.1} parent=1 // pred_check_branch
      %39 = sbr.rel (0) target = $region13
    $region12: #{tpu_custom_call.1} parent=1 // pred_region
      %s41 = ssub.s32 768, 768
      %42 = vsyncadd [#allocation6], %s41
      %s43 = sshll.u32 [#allocation7], 4
      %s44 = int_to_ptr.vmem [resolvable:$true] %s43
      %49 = dma.hbm_to_vmem [thread:$0]  %s2, 768, %s44, [#allocation6], 128, 128, 8
    $region13: #{tpu_custom_call.1} parent=1 // pred_fallthru
      _
    // Predicated region
    $region14: #{tpu_custom_call.1} parent=1 // pred_check
      _
    $region15: #{tpu_custom_call.1} parent=1 // pred_check_branch
      %51 = sbr.rel (0) target = $region17
    $region16: #{tpu_custom_call.1} parent=1 // pred_region
      _
    $region17: #{tpu_custom_call.1} parent=1 // pred_fallthru
      _
    // Predicated region
    $region18: #{tpu_custom_call.1} parent=1 // pred_check
      _
    $region19: #{tpu_custom_call.1} parent=1 // pred_check_branch
      %53 = sbr.rel (0) target = $region21
    $region20: #{tpu_custom_call.1} parent=1 // pred_region
      %s55 = ssub.s32 9472, 9472
      %56 = vsyncadd [#allocation9], %s55
      %s57 = sshll.u32 [#allocation8], 4
      %s58 = int_to_ptr.vmem [resolvable:$true] %s57
      %63 = dma.hbm_to_vmem [thread:$0]  %s4, 9472, %s58, [#allocation9], 128, 128, 8
    $region21: #{tpu_custom_call.1} parent=1 // pred_fallthru
      _
    // Predicated region
    $region22: #{tpu_custom_call.1} parent=1 // pred_check
      _
    $region23: #{tpu_custom_call.1} parent=1 // pred_check_branch
      %65 = sbr.rel (0) target = $region25
    $region24: #{tpu_custom_call.1} parent=1 // pred_region
      %66 = dma.done [#allocation3], 256
    $region25: #{tpu_custom_call.1} parent=1 // pred_fallthru
      _
    // Predicated region
    $region26: #{tpu_custom_call.1} parent=1 // pred_check
      _
    $region27: #{tpu_custom_call.1} parent=1 // pred_check_branch
      %68 = sbr.rel (0) target = $region29
    $region28: #{tpu_custom_call.1} parent=1 // pred_region
      %69 = dma.done [#allocation6], 256
    $region29: #{tpu_custom_call.1} parent=1 // pred_fallthru
      _
    // Predicated region
    $region30: #{tpu_custom_call.1} parent=1 // pred_check
      _
    $region31: #{tpu_custom_call.1} parent=1 // pred_check_branch
      %71 = sbr.rel (0) target = $region33
    $region32: #{tpu_custom_call.1} parent=1 // pred_region
      %72 = dma.done [#allocation6], 768
    $region33: #{tpu_custom_call.1} parent=1 // pred_fallthru
      _
    // Predicated region
    $region34: #{tpu_custom_call.1} parent=1 // pred_check
      _
    $region35: #{tpu_custom_call.1} parent=1 // pred_check_branch
      %74 = sbr.rel (0) target = $region37
    $region36: #{tpu_custom_call.1} parent=1 // pred_region
      %75 = dma.done [#allocation9], 9472
    $region37: #{tpu_custom_call.1} parent=1 // pred_fallthru
      _
    %v76 = vld [vmem:[#allocation2] sm:$0xff]
    %v77 = vld [vmem:[#allocation2 + $0x8] sm:$0xff]
    %v78 = vld [vmem:[#allocation5] sm:$0xff]
    %v79 = vld [vmem:[#allocation5 + $0x8] sm:$0xff]
    %v80 = vld [vmem:[#allocation8] sm:$0xff]
    %v81 = vld [vmem:[#allocation8 + $0x8] sm:$0xff]
    %v82 = vld [vmem:[#allocation8 + $0x10] sm:$0xff]
    %v83 = vld [vmem:[#allocation8 + $0x18] sm:$0xff]
    %v84 = vld [vmem:[#allocation8 + $0x20] sm:$0x1]
    %v85 = vld [vmem:[#allocation8 + $0x28] sm:$0xff]
    %v86 = vld [vmem:[#allocation8 + $0x30] sm:$0xff]
    %v87 = vld [vmem:[#allocation8 + $0x38] sm:$0xff]
    %v88 = vld [vmem:[#allocation8 + $0x40] sm:$0xff]
    %v89 = vld [vmem:[#allocation8 + $0x48] sm:$0xff]
    %v90 = vld [vmem:[#allocation8 + $0x50] sm:$0xff]
    %v91 = vld [vmem:[#allocation8 + $0x58] sm:$0xff]
    %v92 = vld [vmem:[#allocation8 + $0x60] sm:$0xff]
    %v93 = vld [vmem:[#allocation8 + $0x68] sm:$0x1]
    %v94 = vld [vmem:[#allocation7] sm:$0xff]
    %v95 = vld [vmem:[#allocation7 + $0x8] sm:$0xff]
    %vm96 = vcmask 130048
    %v98 = vsel %vm96, %v76, 0
    %v101 = vsel %vm96, %v77, 0
    %103 = vmatprep.subr.mxu0 0.0
    %104 = vmatpush1.msra.mxu0 %v78
    %105 = vmatprep.subr.mxu0 0.0
    %106 = vmatpush1.msra.mxu0 %v79
    %107 = vmatprep.subr.mxu0 0.0
    %108 = vmatpush1.msra.mxu0 0.0
    %109 = vmatprep.subr.mxu0 0.0
    %110 = vmatpush1.msra.mxu0 0.0
    %111 = vmatprep.subr.mxu0 0.0
    %112 = vmatpush1.msra.mxu0 0.0
    %113 = vmatprep.subr.mxu0 0.0
    %114 = vmatpush1.msra.mxu0 0.0
    %115 = vmatprep.subr.mxu0 0.0
    %116 = vmatpush1.msra.mxu0 0.0
    %117 = vmatprep.subr.mxu0 0.0
    %118 = vmatpush1.msra.mxu0 0.0
    %119 = vmatprep.subr.mxu0 0.0
    %120 = vmatpush1.msra.mxu0 0.0
    %121 = vmatprep.subr.mxu0 0.0
    %122 = vmatpush1.msra.mxu0 0.0
    %123 = vmatprep.subr.mxu0 0.0
    %124 = vmatpush1.msra.mxu0 0.0
    %125 = vmatprep.subr.mxu0 0.0
    %126 = vmatpush1.msra.mxu0 0.0
    %127 = vmatprep.subr.mxu0 0.0
    %128 = vmatpush1.msra.mxu0 0.0
    %129 = vmatprep.subr.mxu0 0.0
    %130 = vmatpush1.msra.mxu0 0.0
    %131 = vmatprep.subr.mxu0 0.0
    %132 = vmatpush1.msra.mxu0 0.0
    %133 = vmatprep.subr.mxu0 0.0
    %134 = vmatpush1.msra.mxu0 0.0
    %135 = vmatprep.subr.mxu0 0.0
    %136 = vmatpush1.msra.mxu0 0.0
    %137 = vmatprep.subr.mxu0 0.0
    %138 = vmatpush1.msra.mxu0 0.0
    %139 = vmatprep.subr.mxu0 0.0
    %140 = vmatpush1.msra.mxu0 0.0
    %141 = vmatprep.subr.mxu0 0.0
    %142 = vmatpush1.msra.mxu0 0.0
    %143 = vmatprep.subr.mxu0 0.0
    %144 = vmatpush1.msra.mxu0 0.0
    %145 = vmatprep.subr.mxu0 0.0
    %146 = vmatpush1.msra.mxu0 0.0
    %147 = vmatprep.subr.mxu0 0.0
    %148 = vmatpush1.msra.mxu0 0.0
    %149 = vmatprep.subr.mxu0 0.0
    %150 = vmatpush1.msra.mxu0 0.0
    %151 = vmatprep.subr.mxu0 0.0
    %152 = vmatpush1.msra.mxu0 0.0
    %153 = vmatprep.subr.mxu0 0.0
    %154 = vmatpush1.msra.mxu0 0.0
    %155 = vmatprep.subr.mxu0 0.0
    %156 = vmatpush1.msra.mxu0 0.0
    %157 = vmatprep.subr.mxu0 0.0
    %158 = vmatpush1.msra.mxu0 0.0
    %159 = vmatprep.subr.mxu0 0.0
    %160 = vmatpush1.msra.mxu0 0.0
    %161 = vmatprep.subr.mxu0 0.0
    %162 = vmatpush1.msra.mxu0 0.0
    %163 = vmatprep.subr.mxu0 0.0
    %164 = vmatpush1.msra.mxu0 0.0
    %165 = vmatprep.subr.mxu0 0.0
    %166 = vmatpush1.msra.mxu0 0.0
    %167 = vmatprep.mubr.f32.mxu0 0.0
    %168 = vmatmul.mubr.f32.gmra.mrb[0].mxu0 %v98
    %v169 = vpop.f32.mrb[0].mxu0
    %v170 = vadd.f32 %v94, %v169
    %v171 = vpop.f32.mrb[0].mxu0
    %172 = vmatprep.mubr.f32.mxu0 0.0
    %173 = vmatmul.mubr.f32.gmra.mrb[0].mxu0 %v101
    %v174 = vpop.f32.mrb[0].mxu0
    %v175 = vadd.f32 %v95, %v174
    %v176 = vpop.f32.mrb[0].mxu0
    %177 = vdwg.mxu0
    %v178 = vlaneseq
    %v179 = vshrl.u32 %v178, 7
    %v180 = vsub.s32 0, %v179
    %v181 = vrot.slane %v84, %v180
    %vm182 = vcmask 261120
    %v184 = vsel %vm182, %v170, 0
    %v187 = vsel %vm182, %v175, 0
    %189 = vmatprep.subr.mxu0 0.0
    %190 = vmatpush1.msra.mxu0 %v80
    %191 = vmatprep.subr.mxu0 0.0
    %192 = vmatpush1.msra.mxu0 %v81
    %193 = vmatprep.subr.mxu0 0.0
    %194 = vmatpush1.msra.mxu0 %v82
    %195 = vmatprep.subr.mxu0 0.0
    %196 = vmatpush1.msra.mxu0 %v83
    %197 = vmatprep.subr.mxu0 0.0
    %198 = vmatpush1.msra.mxu0 0.0
    %199 = vmatprep.subr.mxu0 0.0
    %200 = vmatpush1.msra.mxu0 0.0
    %201 = vmatprep.subr.mxu0 0.0
    %202 = vmatpush1.msra.mxu0 0.0
    %203 = vmatprep.subr.mxu0 0.0
    %204 = vmatpush1.msra.mxu0 0.0
    %205 = vmatprep.subr.mxu0 0.0
    %206 = vmatpush1.msra.mxu0 0.0
    %207 = vmatprep.subr.mxu0 0.0
    %208 = vmatpush1.msra.mxu0 0.0
    %209 = vmatprep.subr.mxu0 0.0
    %210 = vmatpush1.msra.mxu0 0.0
    %211 = vmatprep.subr.mxu0 0.0
    %212 = vmatpush1.msra.mxu0 0.0
    %213 = vmatprep.subr.mxu0 0.0
    %214 = vmatpush1.msra.mxu0 0.0
    %215 = vmatprep.subr.mxu0 0.0
    %216 = vmatpush1.msra.mxu0 0.0
    %217 = vmatprep.subr.mxu0 0.0
    %218 = vmatpush1.msra.mxu0 0.0
    %219 = vmatprep.subr.mxu0 0.0
    %220 = vmatpush1.msra.mxu0 0.0
    %221 = vmatprep.subr.mxu0 0.0
    %222 = vmatpush1.msra.mxu0 0.0
    %223 = vmatprep.subr.mxu0 0.0
    %224 = vmatpush1.msra.mxu0 0.0
    %225 = vmatprep.subr.mxu0 0.0
    %226 = vmatpush1.msra.mxu0 0.0
    %227 = vmatprep.subr.mxu0 0.0
    %228 = vmatpush1.msra.mxu0 0.0
    %229 = vmatprep.subr.mxu0 0.0
    %230 = vmatpush1.msra.mxu0 0.0
    %231 = vmatprep.subr.mxu0 0.0
    %232 = vmatpush1.msra.mxu0 0.0
    %233 = vmatprep.subr.mxu0 0.0
    %234 = vmatpush1.msra.mxu0 0.0
    %235 = vmatprep.subr.mxu0 0.0
    %236 = vmatpush1.msra.mxu0 0.0
    %237 = vmatprep.subr.mxu0 0.0
    %238 = vmatpush1.msra.mxu0 0.0
    %239 = vmatprep.subr.mxu0 0.0
    %240 = vmatpush1.msra.mxu0 0.0
    %241 = vmatprep.subr.mxu0 0.0
    %242 = vmatpush1.msra.mxu0 0.0
    %243 = vmatprep.subr.mxu0 0.0
    %244 = vmatpush1.msra.mxu0 0.0
    %245 = vmatprep.subr.mxu0 0.0
    %246 = vmatpush1.msra.mxu0 0.0
    %247 = vmatprep.subr.mxu0 0.0
    %248 = vmatpush1.msra.mxu0 0.0
    %249 = vmatprep.subr.mxu0 0.0
    %250 = vmatpush1.msra.mxu0 0.0
    %251 = vmatprep.subr.mxu0 0.0
    %252 = vmatpush1.msra.mxu0 0.0
    %253 = vmatprep.mubr.f32.mxu0 0.0
    %254 = vmatmul.mubr.f32.gmra.mrb[0].mxu0 %v184
    %v255 = vpop.f32.mrb[0].mxu0
    %v256 = vadd.f32 %v181, %v255
    %v257 = vpop.f32.mrb[0].mxu0
    %258 = vmatprep.mubr.f32.mxu0 0.0
    %259 = vmatmul.mubr.f32.gmra.mrb[0].mxu0 %v187
    %v260 = vpop.f32.mrb[0].mxu0
    %v261 = vadd.f32 %v181, %v260
    %v262 = vpop.f32.mrb[0].mxu0
    %263 = vdwg.mxu0
    %v264 = vmax.f32 %v256, 0.0
    %v265 = vmax.f32 %v261, 0.0
    %v266 = vlaneseq
    %v267 = vshrl.u32 %v266, 7
    %v268 = vsub.s32 0, %v267
    %v269 = vrot.slane %v93, %v268
    %vm270 = vcmask 523264
    %v272 = vsel %vm270, %v264, 0
    %v275 = vsel %vm270, %v265, 0
    %277 = vmatprep.subr.mxu0 0.0
    %278 = vmatpush1.msra.mxu0 %v85
    %279 = vmatprep.subr.mxu0 0.0
    %280 = vmatpush1.msra.mxu0 %v86
    %281 = vmatprep.subr.mxu0 0.0
    %282 = vmatpush1.msra.mxu0 %v87
    %283 = vmatprep.subr.mxu0 0.0
    %284 = vmatpush1.msra.mxu0 %v88
    %285 = vmatprep.subr.mxu0 0.0
    %286 = vmatpush1.msra.mxu0 %v89
    %287 = vmatprep.subr.mxu0 0.0
    %288 = vmatpush1.msra.mxu0 %v90
    %289 = vmatprep.subr.mxu0 0.0
    %290 = vmatpush1.msra.mxu0 %v91
    %291 = vmatprep.subr.mxu0 0.0
    %292 = vmatpush1.msra.mxu0 %v92
    %293 = vmatprep.subr.mxu0 0.0
    %294 = vmatpush1.msra.mxu0 0.0
    %295 = vmatprep.subr.mxu0 0.0
    %296 = vmatpush1.msra.mxu0 0.0
    %297 = vmatprep.subr.mxu0 0.0
    %298 = vmatpush1.msra.mxu0 0.0
    %299 = vmatprep.subr.mxu0 0.0
    %300 = vmatpush1.msra.mxu0 0.0
    %301 = vmatprep.subr.mxu0 0.0
    %302 = vmatpush1.msra.mxu0 0.0
    %303 = vmatprep.subr.mxu0 0.0
    %304 = vmatpush1.msra.mxu0 0.0
    %305 = vmatprep.subr.mxu0 0.0
    %306 = vmatpush1.msra.mxu0 0.0
    %307 = vmatprep.subr.mxu0 0.0
    %308 = vmatpush1.msra.mxu0 0.0
    %309 = vmatprep.subr.mxu0 0.0
    %310 = vmatpush1.msra.mxu0 0.0
    %311 = vmatprep.subr.mxu0 0.0
    %312 = vmatpush1.msra.mxu0 0.0
    %313 = vmatprep.subr.mxu0 0.0
    %314 = vmatpush1.msra.mxu0 0.0
    %315 = vmatprep.subr.mxu0 0.0
    %316 = vmatpush1.msra.mxu0 0.0
    %317 = vmatprep.subr.mxu0 0.0
    %318 = vmatpush1.msra.mxu0 0.0
    %319 = vmatprep.subr.mxu0 0.0
    %320 = vmatpush1.msra.mxu0 0.0
    %321 = vmatprep.subr.mxu0 0.0
    %322 = vmatpush1.msra.mxu0 0.0
    %323 = vmatprep.subr.mxu0 0.0
    %324 = vmatpush1.msra.mxu0 0.0
    %325 = vmatprep.subr.mxu0 0.0
    %326 = vmatpush1.msra.mxu0 0.0
    %327 = vmatprep.subr.mxu0 0.0
    %328 = vmatpush1.msra.mxu0 0.0
    %329 = vmatprep.subr.mxu0 0.0
    %330 = vmatpush1.msra.mxu0 0.0
    %331 = vmatprep.subr.mxu0 0.0
    %332 = vmatpush1.msra.mxu0 0.0
    %333 = vmatprep.subr.mxu0 0.0
    %334 = vmatpush1.msra.mxu0 0.0
    %335 = vmatprep.subr.mxu0 0.0
    %336 = vmatpush1.msra.mxu0 0.0
    %337 = vmatprep.subr.mxu0 0.0
    %338 = vmatpush1.msra.mxu0 0.0
    %339 = vmatprep.subr.mxu0 0.0
    %340 = vmatpush1.msra.mxu0 0.0
    %341 = vmatprep.mubr.f32.mxu0 0.0
    %342 = vmatmul.mubr.f32.gmra.mrb[0].mxu0 %v272
    %v343 = vpop.f32.mrb[0].mxu0
    %v344 = vadd.f32 %v269, %v343
    %v345 = vpop.f32.mrb[0].mxu0
    %346 = vmatprep.mubr.f32.mxu0 0.0
    %347 = vmatmul.mubr.f32.gmra.mrb[0].mxu0 %v275
    %v348 = vpop.f32.mrb[0].mxu0
    %v349 = vadd.f32 %v269, %v348
    %v350 = vpop.f32.mrb[0].mxu0
    %351 = vdwg.mxu0
    %v352 = vmax.f32 %v344, 0.0
    %v353 = vmax.f32 %v349, 0.0
    %v354 = vld [vmem:[#allocation8 + $0x70] sm:$0xff]
    %v355 = vld [vmem:[#allocation8 + $0x78] sm:$0xff]
    %v356 = vld [vmem:[#allocation8 + $0x80] sm:$0xff]
    %v357 = vld [vmem:[#allocation8 + $0x88] sm:$0xff]
    %v358 = vld [vmem:[#allocation8 + $0x90] sm:$0x1]
    %v359 = vld [vmem:[#allocation8 + $0x98] sm:$0xff]
    %v360 = vld [vmem:[#allocation8 + $0xa0] sm:$0xff]
    %v361 = vld [vmem:[#allocation8 + $0xa8] sm:$0xff]
    %v362 = vld [vmem:[#allocation8 + $0xb0] sm:$0xff]
    %v363 = vld [vmem:[#allocation8 + $0xb8] sm:$0xff]
    %v364 = vld [vmem:[#allocation8 + $0xc0] sm:$0xff]
    %v365 = vld [vmem:[#allocation8 + $0xc8] sm:$0xff]
    %v366 = vld [vmem:[#allocation8 + $0xd0] sm:$0xff]
    %v367 = vld [vmem:[#allocation8 + $0xd8] sm:$0x1]
    %s368 = scalar_lea.vmem [#allocation7], 16
    %v369 = vld [vmem:[%s368] sm:$0xff]
    %v370 = vld [vmem:[%s368 + $0x8] sm:$0xff]
    %371 = vmatprep.subr.mxu0 0.0
    %372 = vmatpush1.msra.mxu0 %v352
    %373 = vmatprep.subr.mxu0 0.0
    %374 = vmatpush1.msra.mxu0 %v353
    %375 = vmatprep.subr.mxu0 0.0
    %376 = vmatpush1.msra.mxu0 0.0
    %377 = vmatprep.subr.mxu0 0.0
    %378 = vmatpush1.msra.mxu0 0.0
    %379 = vmatprep.subr.mxu0 0.0
    %380 = vmatpush1.msra.mxu0 0.0
    %381 = vmatprep.subr.mxu0 0.0
    %382 = vmatpush1.msra.mxu0 0.0
    %383 = vmatprep.subr.mxu0 0.0
    %384 = vmatpush1.msra.mxu0 0.0
    %385 = vmatprep.subr.mxu0 0.0
    %386 = vmatpush1.msra.mxu0 0.0
    %387 = vmatprep.subr.mxu0 0.0
    %388 = vmatpush1.msra.mxu0 0.0
    %389 = vmatprep.subr.mxu0 0.0
    %390 = vmatpush1.msra.mxu0 0.0
    %391 = vmatprep.subr.mxu0 0.0
    %392 = vmatpush1.msra.mxu0 0.0
    %393 = vmatprep.subr.mxu0 0.0
    %394 = vmatpush1.msra.mxu0 0.0
    %395 = vmatprep.subr.mxu0 0.0
    %396 = vmatpush1.msra.mxu0 0.0
    %397 = vmatprep.subr.mxu0 0.0
    %398 = vmatpush1.msra.mxu0 0.0
    %399 = vmatprep.subr.mxu0 0.0
    %400 = vmatpush1.msra.mxu0 0.0
    %401 = vmatprep.subr.mxu0 0.0
    %402 = vmatpush1.msra.mxu0 0.0
    %403 = vmatprep.subr.mxu0 0.0
    %404 = vmatpush1.msra.mxu0 0.0
    %405 = vmatprep.subr.mxu0 0.0
    %406 = vmatpush1.msra.mxu0 0.0
    %407 = vmatprep.subr.mxu0 0.0
    %408 = vmatpush1.msra.mxu0 0.0
    %409 = vmatprep.subr.mxu0 0.0
    %410 = vmatpush1.msra.mxu0 0.0
    %411 = vmatprep.subr.mxu0 0.0
    %412 = vmatpush1.msra.mxu0 0.0
    %413 = vmatprep.subr.mxu0 0.0
    %414 = vmatpush1.msra.mxu0 0.0
    %415 = vmatprep.subr.mxu0 0.0
    %416 = vmatpush1.msra.mxu0 0.0
    %417 = vmatprep.subr.mxu0 0.0
    %418 = vmatpush1.msra.mxu0 0.0
    %419 = vmatprep.subr.mxu0 0.0
    %420 = vmatpush1.msra.mxu0 0.0
    %421 = vmatprep.subr.mxu0 0.0
    %422 = vmatpush1.msra.mxu0 0.0
    %423 = vmatprep.subr.mxu0 0.0
    %424 = vmatpush1.msra.mxu0 0.0
    %425 = vmatprep.subr.mxu0 0.0
    %426 = vmatpush1.msra.mxu0 0.0
    %427 = vmatprep.subr.mxu0 0.0
    %428 = vmatpush1.msra.mxu0 0.0
    %429 = vmatprep.subr.mxu0 0.0
    %430 = vmatpush1.msra.mxu0 0.0
    %431 = vmatprep.subr.mxu0 0.0
    %432 = vmatpush1.msra.mxu0 0.0
    %433 = vmatprep.subr.mxu0 0.0
    %434 = vmatpush1.msra.mxu0 0.0
    %435 = vmatprep.mubr.f32.mxu0 0.0
    %436 = vmatmul.mubr.f32.gmra.mrb[0].mxu0 %v98
    %v437 = vpop.f32.mrb[0].mxu0
    %v438 = vadd.f32 %v369, %v437
    %v439 = vpop.f32.mrb[0].mxu0
    %440 = vmatprep.mubr.f32.mxu0 0.0
    %441 = vmatmul.mubr.f32.gmra.mrb[0].mxu0 %v101
    %v442 = vpop.f32.mrb[0].mxu0
    %v443 = vadd.f32 %v370, %v442
    %v444 = vpop.f32.mrb[0].mxu0
    %445 = vdwg.mxu0
    %v446 = vlaneseq
    %v447 = vshrl.u32 %v446, 7
    %v448 = vsub.s32 0, %v447
    %v449 = vrot.slane %v358, %v448
    %v451 = vsel %vm182, %v438, 0
    %v454 = vsel %vm182, %v443, 0
    %456 = vmatprep.subr.mxu0 0.0
    %457 = vmatpush1.msra.mxu0 %v354
    %458 = vmatprep.subr.mxu0 0.0
    %459 = vmatpush1.msra.mxu0 %v355
    %460 = vmatprep.subr.mxu0 0.0
    %461 = vmatpush1.msra.mxu0 %v356
    %462 = vmatprep.subr.mxu0 0.0
    %463 = vmatpush1.msra.mxu0 %v357
    %464 = vmatprep.subr.mxu0 0.0
    %465 = vmatpush1.msra.mxu0 0.0
    %466 = vmatprep.subr.mxu0 0.0
    %467 = vmatpush1.msra.mxu0 0.0
    %468 = vmatprep.subr.mxu0 0.0
    %469 = vmatpush1.msra.mxu0 0.0
    %470 = vmatprep.subr.mxu0 0.0
    %471 = vmatpush1.msra.mxu0 0.0
    %472 = vmatprep.subr.mxu0 0.0
    %473 = vmatpush1.msra.mxu0 0.0
    %474 = vmatprep.subr.mxu0 0.0
    %475 = vmatpush1.msra.mxu0 0.0
    %476 = vmatprep.subr.mxu0 0.0
    %477 = vmatpush1.msra.mxu0 0.0
    %478 = vmatprep.subr.mxu0 0.0
    %479 = vmatpush1.msra.mxu0 0.0
    %480 = vmatprep.subr.mxu0 0.0
    %481 = vmatpush1.msra.mxu0 0.0
    %482 = vmatprep.subr.mxu0 0.0
    %483 = vmatpush1.msra.mxu0 0.0
    %484 = vmatprep.subr.mxu0 0.0
    %485 = vmatpush1.msra.mxu0 0.0
    %486 = vmatprep.subr.mxu0 0.0
    %487 = vmatpush1.msra.mxu0 0.0
    %488 = vmatprep.subr.mxu0 0.0
    %489 = vmatpush1.msra.mxu0 0.0
    %490 = vmatprep.subr.mxu0 0.0
    %491 = vmatpush1.msra.mxu0 0.0
    %492 = vmatprep.subr.mxu0 0.0
    %493 = vmatpush1.msra.mxu0 0.0
    %494 = vmatprep.subr.mxu0 0.0
    %495 = vmatpush1.msra.mxu0 0.0
    %496 = vmatprep.subr.mxu0 0.0
    %497 = vmatpush1.msra.mxu0 0.0
    %498 = vmatprep.subr.mxu0 0.0
    %499 = vmatpush1.msra.mxu0 0.0
    %500 = vmatprep.subr.mxu0 0.0
    %501 = vmatpush1.msra.mxu0 0.0
    %502 = vmatprep.subr.mxu0 0.0
    %503 = vmatpush1.msra.mxu0 0.0
    %504 = vmatprep.subr.mxu0 0.0
    %505 = vmatpush1.msra.mxu0 0.0
    %506 = vmatprep.subr.mxu0 0.0
    %507 = vmatpush1.msra.mxu0 0.0
    %508 = vmatprep.subr.mxu0 0.0
    %509 = vmatpush1.msra.mxu0 0.0
    %510 = vmatprep.subr.mxu0 0.0
    %511 = vmatpush1.msra.mxu0 0.0
    %512 = vmatprep.subr.mxu0 0.0
    %513 = vmatpush1.msra.mxu0 0.0
    %514 = vmatprep.subr.mxu0 0.0
    %515 = vmatpush1.msra.mxu0 0.0
    %516 = vmatprep.subr.mxu0 0.0
    %517 = vmatpush1.msra.mxu0 0.0
    %518 = vmatprep.subr.mxu0 0.0
    %519 = vmatpush1.msra.mxu0 0.0
    %520 = vmatprep.mubr.f32.mxu0 0.0
    %521 = vmatmul.mubr.f32.gmra.mrb[0].mxu0 %v451
    %v522 = vpop.f32.mrb[0].mxu0
    %v523 = vadd.f32 %v449, %v522
    %v524 = vpop.f32.mrb[0].mxu0
    %525 = vmatprep.mubr.f32.mxu0 0.0
    %526 = vmatmul.mubr.f32.gmra.mrb[0].mxu0 %v454
    %v527 = vpop.f32.mrb[0].mxu0
    %v528 = vadd.f32 %v449, %v527
    %v529 = vpop.f32.mrb[0].mxu0
    %530 = vdwg.mxu0
    %v531 = vmax.f32 %v523, 0.0
    %v532 = vmax.f32 %v528, 0.0
    %v533 = vlaneseq
    %v534 = vshrl.u32 %v533, 7
    %v535 = vsub.s32 0, %v534
    %v536 = vrot.slane %v367, %v535
    %v538 = vsel %vm270, %v531, 0
    %v541 = vsel %vm270, %v532, 0
    %543 = vmatprep.subr.mxu0 0.0
    %544 = vmatpush1.msra.mxu0 %v359
    %545 = vmatprep.subr.mxu0 0.0
    %546 = vmatpush1.msra.mxu0 %v360
    %547 = vmatprep.subr.mxu0 0.0
    %548 = vmatpush1.msra.mxu0 %v361
    %549 = vmatprep.subr.mxu0 0.0
    %550 = vmatpush1.msra.mxu0 %v362
    %551 = vmatprep.subr.mxu0 0.0
    %552 = vmatpush1.msra.mxu0 %v363
    %553 = vmatprep.subr.mxu0 0.0
    %554 = vmatpush1.msra.mxu0 %v364
    %555 = vmatprep.subr.mxu0 0.0
    %556 = vmatpush1.msra.mxu0 %v365
    %557 = vmatprep.subr.mxu0 0.0
    %558 = vmatpush1.msra.mxu0 %v366
    %559 = vmatprep.subr.mxu0 0.0
    %560 = vmatpush1.msra.mxu0 0.0
    %561 = vmatprep.subr.mxu0 0.0
    %562 = vmatpush1.msra.mxu0 0.0
    %563 = vmatprep.subr.mxu0 0.0
    %564 = vmatpush1.msra.mxu0 0.0
    %565 = vmatprep.subr.mxu0 0.0
    %566 = vmatpush1.msra.mxu0 0.0
    %567 = vmatprep.subr.mxu0 0.0
    %568 = vmatpush1.msra.mxu0 0.0
    %569 = vmatprep.subr.mxu0 0.0
    %570 = vmatpush1.msra.mxu0 0.0
    %571 = vmatprep.subr.mxu0 0.0
    %572 = vmatpush1.msra.mxu0 0.0
    %573 = vmatprep.subr.mxu0 0.0
    %574 = vmatpush1.msra.mxu0 0.0
    %575 = vmatprep.subr.mxu0 0.0
    %576 = vmatpush1.msra.mxu0 0.0
    %577 = vmatprep.subr.mxu0 0.0
    %578 = vmatpush1.msra.mxu0 0.0
    %579 = vmatprep.subr.mxu0 0.0
    %580 = vmatpush1.msra.mxu0 0.0
    %581 = vmatprep.subr.mxu0 0.0
    %582 = vmatpush1.msra.mxu0 0.0
    %583 = vmatprep.subr.mxu0 0.0
    %584 = vmatpush1.msra.mxu0 0.0
    %585 = vmatprep.subr.mxu0 0.0
    %586 = vmatpush1.msra.mxu0 0.0
    %587 = vmatprep.subr.mxu0 0.0
    %588 = vmatpush1.msra.mxu0 0.0
    %589 = vmatprep.subr.mxu0 0.0
    %590 = vmatpush1.msra.mxu0 0.0
    %591 = vmatprep.subr.mxu0 0.0
    %592 = vmatpush1.msra.mxu0 0.0
    %593 = vmatprep.subr.mxu0 0.0
    %594 = vmatpush1.msra.mxu0 0.0
    %595 = vmatprep.subr.mxu0 0.0
    %596 = vmatpush1.msra.mxu0 0.0
    %597 = vmatprep.subr.mxu0 0.0
    %598 = vmatpush1.msra.mxu0 0.0
    %599 = vmatprep.subr.mxu0 0.0
    %600 = vmatpush1.msra.mxu0 0.0
    %601 = vmatprep.subr.mxu0 0.0
    %602 = vmatpush1.msra.mxu0 0.0
    %603 = vmatprep.subr.mxu0 0.0
    %604 = vmatpush1.msra.mxu0 0.0
    %605 = vmatprep.subr.mxu0 0.0
    %606 = vmatpush1.msra.mxu0 0.0
    %607 = vmatprep.mubr.f32.mxu0 0.0
    %608 = vmatmul.mubr.f32.gmra.mrb[0].mxu0 %v538
    %v609 = vpop.f32.mrb[0].mxu0
    %v610 = vadd.f32 %v536, %v609
    %v611 = vpop.f32.mrb[0].mxu0
    %612 = vmatprep.mubr.f32.mxu0 0.0
    %613 = vmatmul.mubr.f32.gmra.mrb[0].mxu0 %v541
    %v614 = vpop.f32.mrb[0].mxu0
    %v615 = vadd.f32 %v536, %v614
    %v616 = vpop.f32.mrb[0].mxu0
    %617 = vdwg.mxu0
    %v618 = vmax.f32 %v610, 0.0
    %v619 = vmax.f32 %v615, 0.0
    %v620 = vld [vmem:[#allocation8 + $0xe0] sm:$0xff]
    %v621 = vld [vmem:[#allocation8 + $0xe8] sm:$0xff]
    %v622 = vld [vmem:[#allocation8 + $0xf0] sm:$0xff]
    %v623 = vld [vmem:[#allocation8 + $0xf8] sm:$0xff]
    %v624 = vld [vmem:[#allocation8 + $0x100] sm:$0x1]
    %v625 = vld [vmem:[#allocation8 + $0x108] sm:$0xff]
    %v626 = vld [vmem:[#allocation8 + $0x110] sm:$0xff]
    %v627 = vld [vmem:[#allocation8 + $0x118] sm:$0xff]
    %v628 = vld [vmem:[#allocation8 + $0x120] sm:$0xff]
    %v629 = vld [vmem:[#allocation8 + $0x128] sm:$0xff]
    %v630 = vld [vmem:[#allocation8 + $0x130] sm:$0xff]
    %v631 = vld [vmem:[#allocation8 + $0x138] sm:$0xff]
    %v632 = vld [vmem:[#allocation8 + $0x140] sm:$0xff]
    %v633 = vld [vmem:[#allocation8 + $0x148] sm:$0x1]
    %s634 = scalar_lea.vmem [#allocation7], 32
    %v635 = vld [vmem:[%s634] sm:$0xff]
    %v636 = vld [vmem:[%s634 + $0x8] sm:$0xff]
    %637 = vmatprep.subr.mxu0 0.0
    %638 = vmatpush1.msra.mxu0 %v618
    %639 = vmatprep.subr.mxu0 0.0
    %640 = vmatpush1.msra.mxu0 %v619
    %641 = vmatprep.subr.mxu0 0.0
    %642 = vmatpush1.msra.mxu0 0.0
    %643 = vmatprep.subr.mxu0 0.0
    %644 = vmatpush1.msra.mxu0 0.0
    %645 = vmatprep.subr.mxu0 0.0
    %646 = vmatpush1.msra.mxu0 0.0
    %647 = vmatprep.subr.mxu0 0.0
    %648 = vmatpush1.msra.mxu0 0.0
    %649 = vmatprep.subr.mxu0 0.0
    %650 = vmatpush1.msra.mxu0 0.0
    %651 = vmatprep.subr.mxu0 0.0
    %652 = vmatpush1.msra.mxu0 0.0
    %653 = vmatprep.subr.mxu0 0.0
    %654 = vmatpush1.msra.mxu0 0.0
    %655 = vmatprep.subr.mxu0 0.0
    %656 = vmatpush1.msra.mxu0 0.0
    %657 = vmatprep.subr.mxu0 0.0
    %658 = vmatpush1.msra.mxu0 0.0
    %659 = vmatprep.subr.mxu0 0.0
    %660 = vmatpush1.msra.mxu0 0.0
    %661 = vmatprep.subr.mxu0 0.0
    %662 = vmatpush1.msra.mxu0 0.0
    %663 = vmatprep.subr.mxu0 0.0
    %664 = vmatpush1.msra.mxu0 0.0
    %665 = vmatprep.subr.mxu0 0.0
    %666 = vmatpush1.msra.mxu0 0.0
    %667 = vmatprep.subr.mxu0 0.0
    %668 = vmatpush1.msra.mxu0 0.0
    %669 = vmatprep.subr.mxu0 0.0
    %670 = vmatpush1.msra.mxu0 0.0
    %671 = vmatprep.subr.mxu0 0.0
    %672 = vmatpush1.msra.mxu0 0.0
    %673 = vmatprep.subr.mxu0 0.0
    %674 = vmatpush1.msra.mxu0 0.0
    %675 = vmatprep.subr.mxu0 0.0
    %676 = vmatpush1.msra.mxu0 0.0
    %677 = vmatprep.subr.mxu0 0.0
    %678 = vmatpush1.msra.mxu0 0.0
    %679 = vmatprep.subr.mxu0 0.0
    %680 = vmatpush1.msra.mxu0 0.0
    %681 = vmatprep.subr.mxu0 0.0
    %682 = vmatpush1.msra.mxu0 0.0
    %683 = vmatprep.subr.mxu0 0.0
    %684 = vmatpush1.msra.mxu0 0.0
    %685 = vmatprep.subr.mxu0 0.0
    %686 = vmatpush1.msra.mxu0 0.0
    %687 = vmatprep.subr.mxu0 0.0
    %688 = vmatpush1.msra.mxu0 0.0
    %689 = vmatprep.subr.mxu0 0.0
    %690 = vmatpush1.msra.mxu0 0.0
    %691 = vmatprep.subr.mxu0 0.0
    %692 = vmatpush1.msra.mxu0 0.0
    %693 = vmatprep.subr.mxu0 0.0
    %694 = vmatpush1.msra.mxu0 0.0
    %695 = vmatprep.subr.mxu0 0.0
    %696 = vmatpush1.msra.mxu0 0.0
    %697 = vmatprep.subr.mxu0 0.0
    %698 = vmatpush1.msra.mxu0 0.0
    %699 = vmatprep.subr.mxu0 0.0
    %700 = vmatpush1.msra.mxu0 0.0
    %701 = vmatprep.mubr.f32.mxu0 0.0
    %702 = vmatmul.mubr.f32.gmra.mrb[0].mxu0 %v98
    %v703 = vpop.f32.mrb[0].mxu0
    %v704 = vadd.f32 %v635, %v703
    %v705 = vpop.f32.mrb[0].mxu0
    %706 = vmatprep.mubr.f32.mxu0 0.0
    %707 = vmatmul.mubr.f32.gmra.mrb[0].mxu0 %v101
    %v708 = vpop.f32.mrb[0].mxu0
    %v709 = vadd.f32 %v636, %v708
    %v710 = vpop.f32.mrb[0].mxu0
    %711 = vdwg.mxu0
    %v712 = vlaneseq
    %v713 = vshrl.u32 %v712, 7
    %v714 = vsub.s32 0, %v713
    %v715 = vrot.slane %v624, %v714
    %v717 = vsel %vm182, %v704, 0
    %v720 = vsel %vm182, %v709, 0
    %722 = vmatprep.subr.mxu0 0.0
    %723 = vmatpush1.msra.mxu0 %v620
    %724 = vmatprep.subr.mxu0 0.0
    %725 = vmatpush1.msra.mxu0 %v621
    %726 = vmatprep.subr.mxu0 0.0
    %727 = vmatpush1.msra.mxu0 %v622
    %728 = vmatprep.subr.mxu0 0.0
    %729 = vmatpush1.msra.mxu0 %v623
    %730 = vmatprep.subr.mxu0 0.0
    %731 = vmatpush1.msra.mxu0 0.0
    %732 = vmatprep.subr.mxu0 0.0
    %733 = vmatpush1.msra.mxu0 0.0
    %734 = vmatprep.subr.mxu0 0.0
    %735 = vmatpush1.msra.mxu0 0.0
    %736 = vmatprep.subr.mxu0 0.0
    %737 = vmatpush1.msra.mxu0 0.0
    %738 = vmatprep.subr.mxu0 0.0
    %739 = vmatpush1.msra.mxu0 0.0
    %740 = vmatprep.subr.mxu0 0.0
    %741 = vmatpush1.msra.mxu0 0.0
    %742 = vmatprep.subr.mxu0 0.0
    %743 = vmatpush1.msra.mxu0 0.0
    %744 = vmatprep.subr.mxu0 0.0
    %745 = vmatpush1.msra.mxu0 0.0
    %746 = vmatprep.subr.mxu0 0.0
    %747 = vmatpush1.msra.mxu0 0.0
    %748 = vmatprep.subr.mxu0 0.0
    %749 = vmatpush1.msra.mxu0 0.0
    %750 = vmatprep.subr.mxu0 0.0
    %751 = vmatpush1.msra.mxu0 0.0
    %752 = vmatprep.subr.mxu0 0.0
    %753 = vmatpush1.msra.mxu0 0.0
    %754 = vmatprep.subr.mxu0 0.0
    %755 = vmatpush1.msra.mxu0 0.0
    %756 = vmatprep.subr.mxu0 0.0
    %757 = vmatpush1.msra.mxu0 0.0
    %758 = vmatprep.subr.mxu0 0.0
    %759 = vmatpush1.msra.mxu0 0.0
    %760 = vmatprep.subr.mxu0 0.0
    %761 = vmatpush1.msra.mxu0 0.0
    %762 = vmatprep.subr.mxu0 0.0
    %763 = vmatpush1.msra.mxu0 0.0
    %764 = vmatprep.subr.mxu0 0.0
    %765 = vmatpush1.msra.mxu0 0.0
    %766 = vmatprep.subr.mxu0 0.0
    %767 = vmatpush1.msra.mxu0 0.0
    %768 = vmatprep.subr.mxu0 0.0
    %769 = vmatpush1.msra.mxu0 0.0
    %770 = vmatprep.subr.mxu0 0.0
    %771 = vmatpush1.msra.mxu0 0.0
    %772 = vmatprep.subr.mxu0 0.0
    %773 = vmatpush1.msra.mxu0 0.0
    %774 = vmatprep.subr.mxu0 0.0
    %775 = vmatpush1.msra.mxu0 0.0
    %776 = vmatprep.subr.mxu0 0.0
    %777 = vmatpush1.msra.mxu0 0.0
    %778 = vmatprep.subr.mxu0 0.0
    %779 = vmatpush1.msra.mxu0 0.0
    %780 = vmatprep.subr.mxu0 0.0
    %781 = vmatpush1.msra.mxu0 0.0
    %782 = vmatprep.subr.mxu0 0.0
    %783 = vmatpush1.msra.mxu0 0.0
    %784 = vmatprep.subr.mxu0 0.0
    %785 = vmatpush1.msra.mxu0 0.0
    %786 = vmatprep.mubr.f32.mxu0 0.0
    %787 = vmatmul.mubr.f32.gmra.mrb[0].mxu0 %v717
    %v788 = vpop.f32.mrb[0].mxu0
    %v789 = vadd.f32 %v715, %v788
    %v790 = vpop.f32.mrb[0].mxu0
    %791 = vmatprep.mubr.f32.mxu0 0.0
    %792 = vmatmul.mubr.f32.gmra.mrb[0].mxu0 %v720
    %v793 = vpop.f32.mrb[0].mxu0
    %v794 = vadd.f32 %v715, %v793
    %v795 = vpop.f32.mrb[0].mxu0
    %796 = vdwg.mxu0
    %v797 = vmax.f32 %v789, 0.0
    %v798 = vmax.f32 %v794, 0.0
    %v799 = vlaneseq
    %v800 = vshrl.u32 %v799, 7
    %v801 = vsub.s32 0, %v800
    %v802 = vrot.slane %v633, %v801
    %v804 = vsel %vm270, %v797, 0
    %v807 = vsel %vm270, %v798, 0
    %809 = vmatprep.subr.mxu0 0.0
    %810 = vmatpush1.msra.mxu0 %v625
    %811 = vmatprep.subr.mxu0 0.0
    %812 = vmatpush1.msra.mxu0 %v626
    %813 = vmatprep.subr.mxu0 0.0
    %814 = vmatpush1.msra.mxu0 %v627
    %815 = vmatprep.subr.mxu0 0.0
    %816 = vmatpush1.msra.mxu0 %v628
    %817 = vmatprep.subr.mxu0 0.0
    %818 = vmatpush1.msra.mxu0 %v629
    %819 = vmatprep.subr.mxu0 0.0
    %820 = vmatpush1.msra.mxu0 %v630
    %821 = vmatprep.subr.mxu0 0.0
    %822 = vmatpush1.msra.mxu0 %v631
    %823 = vmatprep.subr.mxu0 0.0
    %824 = vmatpush1.msra.mxu0 %v632
    %825 = vmatprep.subr.mxu0 0.0
    %826 = vmatpush1.msra.mxu0 0.0
    %827 = vmatprep.subr.mxu0 0.0
    %828 = vmatpush1.msra.mxu0 0.0
    %829 = vmatprep.subr.mxu0 0.0
    %830 = vmatpush1.msra.mxu0 0.0
    %831 = vmatprep.subr.mxu0 0.0
    %832 = vmatpush1.msra.mxu0 0.0
    %833 = vmatprep.subr.mxu0 0.0
    %834 = vmatpush1.msra.mxu0 0.0
    %835 = vmatprep.subr.mxu0 0.0
    %836 = vmatpush1.msra.mxu0 0.0
    %837 = vmatprep.subr.mxu0 0.0
    %838 = vmatpush1.msra.mxu0 0.0
    %839 = vmatprep.subr.mxu0 0.0
    %840 = vmatpush1.msra.mxu0 0.0
    %841 = vmatprep.subr.mxu0 0.0
    %842 = vmatpush1.msra.mxu0 0.0
    %843 = vmatprep.subr.mxu0 0.0
    %844 = vmatpush1.msra.mxu0 0.0
    %845 = vmatprep.subr.mxu0 0.0
    %846 = vmatpush1.msra.mxu0 0.0
    %847 = vmatprep.subr.mxu0 0.0
    %848 = vmatpush1.msra.mxu0 0.0
    %849 = vmatprep.subr.mxu0 0.0
    %850 = vmatpush1.msra.mxu0 0.0
    %851 = vmatprep.subr.mxu0 0.0
    %852 = vmatpush1.msra.mxu0 0.0
    %853 = vmatprep.subr.mxu0 0.0
    %854 = vmatpush1.msra.mxu0 0.0
    %855 = vmatprep.subr.mxu0 0.0
    %856 = vmatpush1.msra.mxu0 0.0
    %857 = vmatprep.subr.mxu0 0.0
    %858 = vmatpush1.msra.mxu0 0.0
    %859 = vmatprep.subr.mxu0 0.0
    %860 = vmatpush1.msra.mxu0 0.0
    %861 = vmatprep.subr.mxu0 0.0
    %862 = vmatpush1.msra.mxu0 0.0
    %863 = vmatprep.subr.mxu0 0.0
    %864 = vmatpush1.msra.mxu0 0.0
    %865 = vmatprep.subr.mxu0 0.0
    %866 = vmatpush1.msra.mxu0 0.0
    %867 = vmatprep.subr.mxu0 0.0
    %868 = vmatpush1.msra.mxu0 0.0
    %869 = vmatprep.subr.mxu0 0.0
    %870 = vmatpush1.msra.mxu0 0.0
    %871 = vmatprep.subr.mxu0 0.0
    %872 = vmatpush1.msra.mxu0 0.0
    %873 = vmatprep.mubr.f32.mxu0 0.0
    %874 = vmatmul.mubr.f32.gmra.mrb[0].mxu0 %v804
    %v875 = vpop.f32.mrb[0].mxu0
    %v876 = vadd.f32 %v802, %v875
    %v877 = vpop.f32.mrb[0].mxu0
    %878 = vmatprep.mubr.f32.mxu0 0.0
    %879 = vmatmul.mubr.f32.gmra.mrb[0].mxu0 %v807
    %v880 = vpop.f32.mrb[0].mxu0
    %v881 = vadd.f32 %v802, %v880
    %v882 = vpop.f32.mrb[0].mxu0
    %883 = vdwg.mxu0
    %v884 = vld [vmem:[%s3] sm:$0x3]
    %v886 = vsel %vm96, %v884, 0
    %888 = vmatprep.subr.mxu0 0.0
    %889 = vmatpush1.msra.mxu0 %v876
    %890 = vmatprep.subr.mxu0 0.0
    %891 = vmatpush1.msra.mxu0 %v881
    %892 = vmatprep.subr.mxu0 0.0
    %893 = vmatpush1.msra.mxu0 0.0
    %894 = vmatprep.subr.mxu0 0.0
    %895 = vmatpush1.msra.mxu0 0.0
    %896 = vmatprep.subr.mxu0 0.0
    %897 = vmatpush1.msra.mxu0 0.0
    %898 = vmatprep.subr.mxu0 0.0
    %899 = vmatpush1.msra.mxu0 0.0
    %900 = vmatprep.subr.mxu0 0.0
    %901 = vmatpush1.msra.mxu0 0.0
    %902 = vmatprep.subr.mxu0 0.0
    %903 = vmatpush1.msra.mxu0 0.0
    %904 = vmatprep.subr.mxu0 0.0
    %905 = vmatpush1.msra.mxu0 0.0
    %906 = vmatprep.subr.mxu0 0.0
    %907 = vmatpush1.msra.mxu0 0.0
    %908 = vmatprep.subr.mxu0 0.0
    %909 = vmatpush1.msra.mxu0 0.0
    %910 = vmatprep.subr.mxu0 0.0
    %911 = vmatpush1.msra.mxu0 0.0
    %912 = vmatprep.subr.mxu0 0.0
    %913 = vmatpush1.msra.mxu0 0.0
    %914 = vmatprep.subr.mxu0 0.0
    %915 = vmatpush1.msra.mxu0 0.0
    %916 = vmatprep.subr.mxu0 0.0
    %917 = vmatpush1.msra.mxu0 0.0
    %918 = vmatprep.subr.mxu0 0.0
    %919 = vmatpush1.msra.mxu0 0.0
    %920 = vmatprep.subr.mxu0 0.0
    %921 = vmatpush1.msra.mxu0 0.0
    %922 = vmatprep.subr.mxu0 0.0
    %923 = vmatpush1.msra.mxu0 0.0
    %924 = vmatprep.subr.mxu0 0.0
    %925 = vmatpush1.msra.mxu0 0.0
    %926 = vmatprep.subr.mxu0 0.0
    %927 = vmatpush1.msra.mxu0 0.0
    %928 = vmatprep.subr.mxu0 0.0
    %929 = vmatpush1.msra.mxu0 0.0
    %930 = vmatprep.subr.mxu0 0.0
    %931 = vmatpush1.msra.mxu0 0.0
    %932 = vmatprep.subr.mxu0 0.0
    %933 = vmatpush1.msra.mxu0 0.0
    %934 = vmatprep.subr.mxu0 0.0
    %935 = vmatpush1.msra.mxu0 0.0
    %936 = vmatprep.subr.mxu0 0.0
    %937 = vmatpush1.msra.mxu0 0.0
    %938 = vmatprep.subr.mxu0 0.0
    %939 = vmatpush1.msra.mxu0 0.0
    %940 = vmatprep.subr.mxu0 0.0
    %941 = vmatpush1.msra.mxu0 0.0
    %942 = vmatprep.subr.mxu0 0.0
    %943 = vmatpush1.msra.mxu0 0.0
    %944 = vmatprep.subr.mxu0 0.0
    %945 = vmatpush1.msra.mxu0 0.0
    %946 = vmatprep.subr.mxu0 0.0
    %947 = vmatpush1.msra.mxu0 0.0
    %948 = vmatprep.subr.mxu0 0.0
    %949 = vmatpush1.msra.mxu0 0.0
    %950 = vmatprep.subr.mxu0 0.0
    %951 = vmatpush1.msra.mxu0 0.0
    %952 = vmatprep.mubr.f32.mxu0 0.0
    %953 = vmatmul.mubr.f32.gmra.mrb[0].mxu0 %v886
    %v954 = vpop.f32.mrb[0].mxu0
    %v955 = vadd.f32 0.0, %v954
    %v956 = vpop.f32.mrb[0].mxu0
    %957 = vdwg.mxu0
    %v958 = vld [vmem:[#allocation8 + $0x150] sm:$0xff]
    %v959 = vld [vmem:[#allocation8 + $0x158] sm:$0xff]
    %v960 = vld [vmem:[#allocation8 + $0x160] sm:$0xff]
    %v961 = vld [vmem:[#allocation8 + $0x168] sm:$0xff]
    %v962 = vld [vmem:[#allocation8 + $0x170] sm:$0x1]
    %v963 = vlaneseq
    %v964 = vshrl.u32 %v963, 7
    %v965 = vsub.s32 0, %v964
    %v966 = vrot.slane %v962, %v965
    %v968 = vsel %vm182, %v955, 0
    %970 = vmatprep.subr.mxu0 0.0
    %971 = vmatpush1.msra.mxu0 %v958
    %972 = vmatprep.subr.mxu0 0.0
    %973 = vmatpush1.msra.mxu0 %v959
    %974 = vmatprep.subr.mxu0 0.0
    %975 = vmatpush1.msra.mxu0 %v960
    %976 = vmatprep.subr.mxu0 0.0
    %977 = vmatpush1.msra.mxu0 %v961
    %978 = vmatprep.subr.mxu0 0.0
    %979 = vmatpush1.msra.mxu0 0.0
    %980 = vmatprep.subr.mxu0 0.0
    %981 = vmatpush1.msra.mxu0 0.0
    %982 = vmatprep.subr.mxu0 0.0
    %983 = vmatpush1.msra.mxu0 0.0
    %984 = vmatprep.subr.mxu0 0.0
    %985 = vmatpush1.msra.mxu0 0.0
    %986 = vmatprep.subr.mxu0 0.0
    %987 = vmatpush1.msra.mxu0 0.0
    %988 = vmatprep.subr.mxu0 0.0
    %989 = vmatpush1.msra.mxu0 0.0
    %990 = vmatprep.subr.mxu0 0.0
    %991 = vmatpush1.msra.mxu0 0.0
    %992 = vmatprep.subr.mxu0 0.0
    %993 = vmatpush1.msra.mxu0 0.0
    %994 = vmatprep.subr.mxu0 0.0
    %995 = vmatpush1.msra.mxu0 0.0
    %996 = vmatprep.subr.mxu0 0.0
    %997 = vmatpush1.msra.mxu0 0.0
    %998 = vmatprep.subr.mxu0 0.0
    %999 = vmatpush1.msra.mxu0 0.0
    %1000 = vmatprep.subr.mxu0 0.0
    %1001 = vmatpush1.msra.mxu0 0.0
    %1002 = vmatprep.subr.mxu0 0.0
    %1003 = vmatpush1.msra.mxu0 0.0
    %1004 = vmatprep.subr.mxu0 0.0
    %1005 = vmatpush1.msra.mxu0 0.0
    %1006 = vmatprep.subr.mxu0 0.0
    %1007 = vmatpush1.msra.mxu0 0.0
    %1008 = vmatprep.subr.mxu0 0.0
    %1009 = vmatpush1.msra.mxu0 0.0
    %1010 = vmatprep.subr.mxu0 0.0
    %1011 = vmatpush1.msra.mxu0 0.0
    %1012 = vmatprep.subr.mxu0 0.0
    %1013 = vmatpush1.msra.mxu0 0.0
    %1014 = vmatprep.subr.mxu0 0.0
    %1015 = vmatpush1.msra.mxu0 0.0
    %1016 = vmatprep.subr.mxu0 0.0
    %1017 = vmatpush1.msra.mxu0 0.0
    %1018 = vmatprep.subr.mxu0 0.0
    %1019 = vmatpush1.msra.mxu0 0.0
    %1020 = vmatprep.subr.mxu0 0.0
    %1021 = vmatpush1.msra.mxu0 0.0
    %1022 = vmatprep.subr.mxu0 0.0
    %1023 = vmatpush1.msra.mxu0 0.0
    %1024 = vmatprep.subr.mxu0 0.0
    %1025 = vmatpush1.msra.mxu0 0.0
    %1026 = vmatprep.subr.mxu0 0.0
    %1027 = vmatpush1.msra.mxu0 0.0
    %1028 = vmatprep.subr.mxu0 0.0
    %1029 = vmatpush1.msra.mxu0 0.0
    %1030 = vmatprep.subr.mxu0 0.0
    %1031 = vmatpush1.msra.mxu0 0.0
    %1032 = vmatprep.subr.mxu0 0.0
    %1033 = vmatpush1.msra.mxu0 0.0
    %1034 = vmatprep.mubr.f32.mxu0 0.0
    %1035 = vmatmul.mubr.f32.gmra.mrb[0].mxu0 %v968
    %v1036 = vpop.f32.mrb[0].mxu0
    %v1037 = vadd.f32 %v966, %v1036
    %v1038 = vpop.f32.mrb[0].mxu0
    %1039 = vdwg.mxu0
    %v1040 = vld [vmem:[#allocation8 + $0x178] sm:$0xff]
    %v1041 = vld [vmem:[#allocation8 + $0x180] sm:$0xff]
    %v1042 = vld [vmem:[#allocation8 + $0x188] sm:$0xff]
    %v1043 = vld [vmem:[#allocation8 + $0x190] sm:$0xff]
    %v1044 = vld [vmem:[#allocation8 + $0x198] sm:$0xff]
    %v1045 = vld [vmem:[#allocation8 + $0x1a0] sm:$0xff]
    %v1046 = vld [vmem:[#allocation8 + $0x1a8] sm:$0xff]
    %v1047 = vld [vmem:[#allocation8 + $0x1b0] sm:$0xff]
    %v1048 = vld [vmem:[#allocation8 + $0x1b8] sm:$0xff]
    %v1049 = vld [vmem:[#allocation8 + $0x1c0] sm:$0xff]
    %v1050 = vld [vmem:[#allocation8 + $0x1c8] sm:$0xff]
    %v1051 = vld [vmem:[#allocation8 + $0x1d0] sm:$0xff]
    %v1052 = vld [vmem:[#allocation8 + $0x1d8] sm:$0xff]
    %v1053 = vld [vmem:[#allocation8 + $0x1e0] sm:$0xff]
    %v1054 = vld [vmem:[#allocation8 + $0x1e8] sm:$0xff]
    %v1055 = vld [vmem:[#allocation8 + $0x1f0] sm:$0xff]
    %v1056 = vld [vmem:[#allocation8 + $0x1f8] sm:$0x1]
    %v1057 = vld [vmem:[#allocation8 + $0x200] sm:$0xff]
    %v1058 = vld [vmem:[#allocation8 + $0x208] sm:$0xff]
    %v1059 = vld [vmem:[#allocation8 + $0x210] sm:$0xff]
    %v1060 = vld [vmem:[#allocation8 + $0x218] sm:$0xff]
    %v1061 = vld [vmem:[#allocation8 + $0x220] sm:$0x1]
    %v1062 = vld [vmem:[#allocation8 + $0x228] sm:$0xff]
    %v1063 = vld [vmem:[#allocation8 + $0x230] sm:$0xff]
    %v1064 = vld [vmem:[#allocation8 + $0x238] sm:$0xff]
    %v1065 = vld [vmem:[#allocation8 + $0x240] sm:$0xff]
    %v1066 = vld [vmem:[#allocation8 + $0x248] sm:$0x1]
    %v1067 = vlaneseq
    %v1068 = vshrl.u32 %v1067, 7
    %v1069 = vsub.s32 0, %v1068
    %v1070 = vrot.slane %v1056, %v1069
    %1071 = vmatprep.subr.mxu0 0.0
    %1072 = vmatpush1.msra.mxu0 %v1040
    %1073 = vmatprep.subr.mxu0 0.0
    %1074 = vmatpush1.msra.mxu0 %v1041
    %1075 = vmatprep.subr.mxu0 0.0
    %1076 = vmatpush1.msra.mxu0 %v1042
    %1077 = vmatprep.subr.mxu0 0.0
    %1078 = vmatpush1.msra.mxu0 %v1043
    %1079 = vmatprep.subr.mxu0 0.0
    %1080 = vmatpush1.msra.mxu0 %v1044
    %1081 = vmatprep.subr.mxu0 0.0
    %1082 = vmatpush1.msra.mxu0 %v1045
    %1083 = vmatprep.subr.mxu0 0.0
    %1084 = vmatpush1.msra.mxu0 %v1046
    %1085 = vmatprep.subr.mxu0 0.0
    %1086 = vmatpush1.msra.mxu0 %v1047
    %1087 = vmatprep.subr.mxu0 0.0
    %1088 = vmatpush1.msra.mxu0 %v1048
    %1089 = vmatprep.subr.mxu0 0.0
    %1090 = vmatpush1.msra.mxu0 %v1049
    %1091 = vmatprep.subr.mxu0 0.0
    %1092 = vmatpush1.msra.mxu0 %v1050
    %1093 = vmatprep.subr.mxu0 0.0
    %1094 = vmatpush1.msra.mxu0 %v1051
    %1095 = vmatprep.subr.mxu0 0.0
    %1096 = vmatpush1.msra.mxu0 %v1052
    %1097 = vmatprep.subr.mxu0 0.0
    %1098 = vmatpush1.msra.mxu0 %v1053
    %1099 = vmatprep.subr.mxu0 0.0
    %1100 = vmatpush1.msra.mxu0 %v1054
    %1101 = vmatprep.subr.mxu0 0.0
    %1102 = vmatpush1.msra.mxu0 %v1055
    %1103 = vmatprep.subr.mxu0 0.0
    %1104 = vmatpush1.msra.mxu0 0.0
    %1105 = vmatprep.subr.mxu0 0.0
    %1106 = vmatpush1.msra.mxu0 0.0
    %1107 = vmatprep.subr.mxu0 0.0
    %1108 = vmatpush1.msra.mxu0 0.0
    %1109 = vmatprep.subr.mxu0 0.0
    %1110 = vmatpush1.msra.mxu0 0.0
    %1111 = vmatprep.subr.mxu0 0.0
    %1112 = vmatpush1.msra.mxu0 0.0
    %1113 = vmatprep.subr.mxu0 0.0
    %1114 = vmatpush1.msra.mxu0 0.0
    %1115 = vmatprep.subr.mxu0 0.0
    %1116 = vmatpush1.msra.mxu0 0.0
    %1117 = vmatprep.subr.mxu0 0.0
    %1118 = vmatpush1.msra.mxu0 0.0
    %1119 = vmatprep.subr.mxu0 0.0
    %1120 = vmatpush1.msra.mxu0 0.0
    %1121 = vmatprep.subr.mxu0 0.0
    %1122 = vmatpush1.msra.mxu0 0.0
    %1123 = vmatprep.subr.mxu0 0.0
    %1124 = vmatpush1.msra.mxu0 0.0
    %1125 = vmatprep.subr.mxu0 0.0
    %1126 = vmatpush1.msra.mxu0 0.0
    %1127 = vmatprep.subr.mxu0 0.0
    %1128 = vmatpush1.msra.mxu0 0.0
    %1129 = vmatprep.subr.mxu0 0.0
    %1130 = vmatpush1.msra.mxu0 0.0
    %1131 = vmatprep.subr.mxu0 0.0
    %1132 = vmatpush1.msra.mxu0 0.0
    %1133 = vmatprep.subr.mxu0 0.0
    %1134 = vmatpush1.msra.mxu0 0.0
    %1135 = vmatprep.mubr.f32.mxu0 0.0
    %1136 = vmatmul.mubr.f32.gmra.mrb[0].mxu0 %v1037
    %v1137 = vpop.f32.mrb[0].mxu0
    %v1138 = vadd.f32 %v1070, %v1137
    %v1139 = vpop.f32.mrb[0].mxu0
    %1140 = vdwg.mxu0
    %vm1141 = vcmp.gt.f32.partialorder %v1138, 20.0
    %v1142 = vmin.f32 %v1138, 20.0
    %v1143 = vmul.f32 %v1142, 1.442695
    %v1144 = vpow.pop %v1143
    %v1145 = vadd.f32 %v1144, 1.0
    %v1146 = vlog2.pop %v1145
    %v1147 = vmul.f32 %v1146, 0.6931472
    %v1148 = vmul.f32 -0.5, %v1144
    %v1149 = vadd.f32 %v1148, 1.0
    %v1150 = vmul.f32 %v1149, %v1144
    %v1151 = vand.u32 2147483647, %v1144
    %vm1152 = vcmp.lt.f32.partialorder %v1151, 0.0004427343
    %v1153 = vsel %vm1152, %v1150, %v1147
    %v1154 = vsel %vm1141, %v1138, %v1153
    %v1155 = vlaneseq
    %v1156 = vshrl.u32 %v1155, 7
    %v1157 = vsub.s32 0, %v1156
    %v1158 = vrot.slane %v1061, %v1157
    %v1160 = vsel %vm182, %v1154, 0
    %1162 = vmatprep.subr.mxu0 0.0
    %1163 = vmatpush1.msra.mxu0 %v1057
    %1164 = vmatprep.subr.mxu0 0.0
    %1165 = vmatpush1.msra.mxu0 %v1058
    %1166 = vmatprep.subr.mxu0 0.0
    %1167 = vmatpush1.msra.mxu0 %v1059
    %1168 = vmatprep.subr.mxu0 0.0
    %1169 = vmatpush1.msra.mxu0 %v1060
    %1170 = vmatprep.subr.mxu0 0.0
    %1171 = vmatpush1.msra.mxu0 0.0
    %1172 = vmatprep.subr.mxu0 0.0
    %1173 = vmatpush1.msra.mxu0 0.0
    %1174 = vmatprep.subr.mxu0 0.0
    %1175 = vmatpush1.msra.mxu0 0.0
    %1176 = vmatprep.subr.mxu0 0.0
    %1177 = vmatpush1.msra.mxu0 0.0
    %1178 = vmatprep.subr.mxu0 0.0
    %1179 = vmatpush1.msra.mxu0 0.0
    %1180 = vmatprep.subr.mxu0 0.0
    %1181 = vmatpush1.msra.mxu0 0.0
    %1182 = vmatprep.subr.mxu0 0.0
    %1183 = vmatpush1.msra.mxu0 0.0
    %1184 = vmatprep.subr.mxu0 0.0
    %1185 = vmatpush1.msra.mxu0 0.0
    %1186 = vmatprep.subr.mxu0 0.0
    %1187 = vmatpush1.msra.mxu0 0.0
    %1188 = vmatprep.subr.mxu0 0.0
    %1189 = vmatpush1.msra.mxu0 0.0
    %1190 = vmatprep.subr.mxu0 0.0
    %1191 = vmatpush1.msra.mxu0 0.0
    %1192 = vmatprep.subr.mxu0 0.0
    %1193 = vmatpush1.msra.mxu0 0.0
    %1194 = vmatprep.subr.mxu0 0.0
    %1195 = vmatpush1.msra.mxu0 0.0
    %1196 = vmatprep.subr.mxu0 0.0
    %1197 = vmatpush1.msra.mxu0 0.0
    %1198 = vmatprep.subr.mxu0 0.0
    %1199 = vmatpush1.msra.mxu0 0.0
    %1200 = vmatprep.subr.mxu0 0.0
    %1201 = vmatpush1.msra.mxu0 0.0
    %1202 = vmatprep.subr.mxu0 0.0
    %1203 = vmatpush1.msra.mxu0 0.0
    %1204 = vmatprep.subr.mxu0 0.0
    %1205 = vmatpush1.msra.mxu0 0.0
    %1206 = vmatprep.subr.mxu0 0.0
    %1207 = vmatpush1.msra.mxu0 0.0
    %1208 = vmatprep.subr.mxu0 0.0
    %1209 = vmatpush1.msra.mxu0 0.0
    %1210 = vmatprep.subr.mxu0 0.0
    %1211 = vmatpush1.msra.mxu0 0.0
    %1212 = vmatprep.subr.mxu0 0.0
    %1213 = vmatpush1.msra.mxu0 0.0
    %1214 = vmatprep.subr.mxu0 0.0
    %1215 = vmatpush1.msra.mxu0 0.0
    %1216 = vmatprep.subr.mxu0 0.0
    %1217 = vmatpush1.msra.mxu0 0.0
    %1218 = vmatprep.subr.mxu0 0.0
    %1219 = vmatpush1.msra.mxu0 0.0
    %1220 = vmatprep.subr.mxu0 0.0
    %1221 = vmatpush1.msra.mxu0 0.0
    %1222 = vmatprep.subr.mxu0 0.0
    %1223 = vmatpush1.msra.mxu0 0.0
    %1224 = vmatprep.subr.mxu0 0.0
    %1225 = vmatpush1.msra.mxu0 0.0
    %1226 = vmatprep.mubr.f32.mxu0 0.0
    %1227 = vmatmul.mubr.f32.gmra.mrb[0].mxu0 %v1160
    %v1228 = vpop.f32.mrb[0].mxu0
    %v1229 = vadd.f32 %v1158, %v1228
    %v1230 = vpop.f32.mrb[0].mxu0
    %1231 = vdwg.mxu0
    %vm1232 = vcmp.gt.f32.partialorder %v1229, 20.0
    %v1233 = vmin.f32 %v1229, 20.0
    %v1234 = vmul.f32 %v1233, 1.442695
    %v1235 = vpow.pop %v1234
    %v1236 = vadd.f32 %v1235, 1.0
    %v1237 = vlog2.pop %v1236
    %v1238 = vmul.f32 %v1237, 0.6931472
    %v1239 = vmul.f32 -0.5, %v1235
    %v1240 = vadd.f32 %v1239, 1.0
    %v1241 = vmul.f32 %v1240, %v1235
    %v1242 = vand.u32 2147483647, %v1235
    %vm1243 = vcmp.lt.f32.partialorder %v1242, 0.0004427343
    %v1244 = vsel %vm1243, %v1241, %v1238
    %v1245 = vsel %vm1232, %v1229, %v1244
    %v1246 = vlaneseq
    %v1247 = vshrl.u32 %v1246, 7
    %v1248 = vsub.s32 0, %v1247
    %v1249 = vrot.slane %v1066, %v1248
    %v1251 = vsel %vm182, %v1245, 0
    %1253 = vmatprep.subr.mxu0 0.0
    %1254 = vmatpush1.msra.mxu0 %v1062
    %1255 = vmatprep.subr.mxu0 0.0
    %1256 = vmatpush1.msra.mxu0 %v1063
    %1257 = vmatprep.subr.mxu0 0.0
    %1258 = vmatpush1.msra.mxu0 %v1064
    %1259 = vmatprep.subr.mxu0 0.0
    %1260 = vmatpush1.msra.mxu0 %v1065
    %1261 = vmatprep.subr.mxu0 0.0
    %1262 = vmatpush1.msra.mxu0 0.0
    %1263 = vmatprep.subr.mxu0 0.0
    %1264 = vmatpush1.msra.mxu0 0.0
    %1265 = vmatprep.subr.mxu0 0.0
    %1266 = vmatpush1.msra.mxu0 0.0
    %1267 = vmatprep.subr.mxu0 0.0
    %1268 = vmatpush1.msra.mxu0 0.0
    %1269 = vmatprep.subr.mxu0 0.0
    %1270 = vmatpush1.msra.mxu0 0.0
    %1271 = vmatprep.subr.mxu0 0.0
    %1272 = vmatpush1.msra.mxu0 0.0
    %1273 = vmatprep.subr.mxu0 0.0
    %1274 = vmatpush1.msra.mxu0 0.0
    %1275 = vmatprep.subr.mxu0 0.0
    %1276 = vmatpush1.msra.mxu0 0.0
    %1277 = vmatprep.subr.mxu0 0.0
    %1278 = vmatpush1.msra.mxu0 0.0
    %1279 = vmatprep.subr.mxu0 0.0
    %1280 = vmatpush1.msra.mxu0 0.0
    %1281 = vmatprep.subr.mxu0 0.0
    %1282 = vmatpush1.msra.mxu0 0.0
    %1283 = vmatprep.subr.mxu0 0.0
    %1284 = vmatpush1.msra.mxu0 0.0
    %1285 = vmatprep.subr.mxu0 0.0
    %1286 = vmatpush1.msra.mxu0 0.0
    %1287 = vmatprep.subr.mxu0 0.0
    %1288 = vmatpush1.msra.mxu0 0.0
    %1289 = vmatprep.subr.mxu0 0.0
    %1290 = vmatpush1.msra.mxu0 0.0
    %1291 = vmatprep.subr.mxu0 0.0
    %1292 = vmatpush1.msra.mxu0 0.0
    %1293 = vmatprep.subr.mxu0 0.0
    %1294 = vmatpush1.msra.mxu0 0.0
    %1295 = vmatprep.subr.mxu0 0.0
    %1296 = vmatpush1.msra.mxu0 0.0
    %1297 = vmatprep.subr.mxu0 0.0
    %1298 = vmatpush1.msra.mxu0 0.0
    %1299 = vmatprep.subr.mxu0 0.0
    %1300 = vmatpush1.msra.mxu0 0.0
    %1301 = vmatprep.subr.mxu0 0.0
    %1302 = vmatpush1.msra.mxu0 0.0
    %1303 = vmatprep.subr.mxu0 0.0
    %1304 = vmatpush1.msra.mxu0 0.0
    %1305 = vmatprep.subr.mxu0 0.0
    %1306 = vmatpush1.msra.mxu0 0.0
    %1307 = vmatprep.subr.mxu0 0.0
    %1308 = vmatpush1.msra.mxu0 0.0
    %1309 = vmatprep.subr.mxu0 0.0
    %1310 = vmatpush1.msra.mxu0 0.0
    %1311 = vmatprep.subr.mxu0 0.0
    %1312 = vmatpush1.msra.mxu0 0.0
    %1313 = vmatprep.subr.mxu0 0.0
    %1314 = vmatpush1.msra.mxu0 0.0
    %1315 = vmatprep.subr.mxu0 0.0
    %1316 = vmatpush1.msra.mxu0 0.0
    %1317 = vmatprep.mubr.f32.mxu0 0.0
    %1318 = vmatmul.mubr.f32.gmra.mrb[0].mxu0 %v1251
    %v1319 = vpop.f32.mrb[0].mxu0
    %v1320 = vadd.f32 %v1249, %v1319
    %v1321 = vpop.f32.mrb[0].mxu0
    %1322 = vdwg.mxu0
    %v1323 = vadd.f32 %v1037, %v1320
    %1324 = vst [vmem:[#allocation10] sm:$0x3] %v1323
    // Predicated region
    $region38: #{tpu_custom_call.1} parent=1 // pred_check
      _
    $region39: #{tpu_custom_call.1} parent=1 // pred_check_branch
      %1326 = sbr.rel (0) target = $region41
    $region40: #{tpu_custom_call.1} parent=1 // pred_region
      %s1328 = ssub.s32 32, 32
      %1329 = vsyncadd [#allocation4], %s1328
      %s1331 = sshll.u32 [#allocation10], 4
      %s1332 = int_to_ptr.vmem [resolvable:$true] %s1331
      %1334 = dma.vmem_to_hbm [thread:$0]  %s1332, 32, %s5, [#allocation4]
    $region41: #{tpu_custom_call.1} parent=1 // pred_fallthru
      _
    // Predicated region
    $region42: #{tpu_custom_call.1} parent=1 // pred_check
      _
    $region43: #{tpu_custom_call.1} parent=1 // pred_check_branch
      %1336 = sbr.rel (0) target = $region45
    $region44: #{tpu_custom_call.1} parent=1 // pred_region
      %1337 = dma.done [#allocation4], 32
    $region45: #{tpu_custom_call.1} parent=1 // pred_fallthru
      _
    %1338 = vsyncpa [#allocation3], 1
    %1339 = vsyncpa [#allocation6], 1
    %1340 = vsyncpa [#allocation9], 1
    %1341 = vsyncpa [#allocation4], 1

</llo_original>
